<compile_context>
chip_gen: v6e
topology: v6e:2x2x1
jax: 0.10.0
libtpu: 0.0.40
codegen_flags: <defaults>
</compile_context>

<pallas_src>
import functools

import numpy as np

import jax
import jax.numpy as jnp
from jax.experimental import pallas as pl
from jax.experimental.pallas import tpu as pltpu


_DUMMY_BOX = np.array([0.5, 0.5, 0.1, 0.1], dtype=np.float32)  # valid pad box (no 0/0)


# ----------------------------------------------------------------------------------
# Pallas kernel: pairwise matching-cost matrix for one image (one grid step)
# ----------------------------------------------------------------------------------
def _cost_kernel(pred_ref, tgt_t_ref, lab_col_ref, lab_row_ref, c_ref,
                 *, w_class: float, w_bbox: float, w_giou: float):
    p = pred_ref[...]        # (TP, 4)  pred boxes, cxcywh
    tt = tgt_t_ref[...]      # (4, TP)  target boxes, cxcywh (transposed)

    # prediction coordinates as column vectors (TP, 1)
    pcx = p[:, 0:1]
    pcy = p[:, 1:2]
    pw = p[:, 2:3]
    ph = p[:, 3:4]
    # target coordinates as row vectors (1, TP)
    tcx = tt[0:1, :]
    tcy = tt[1:2, :]
    tw = tt[2:3, :]
    th = tt[3:4, :]

    # --- cost_bbox: L1 cdist in cxcywh space ------------------------------------
    cost_bbox = (jnp.abs(pcx - tcx) + jnp.abs(pcy - tcy)
                 + jnp.abs(pw - tw) + jnp.abs(ph - th))            # (TP, TP)

    # --- cxcywh -> xyxy -----------------------------------------------------------
    px0 = pcx - 0.5 * pw
    py0 = pcy - 0.5 * ph
    px1 = pcx + 0.5 * pw
    py1 = pcy + 0.5 * ph
    tx0 = tcx - 0.5 * tw
    ty0 = tcy - 0.5 * th
    tx1 = tcx + 0.5 * tw
    ty1 = tcy + 0.5 * th

    # --- generalized IoU ----------------------------------------------------------
    # NOTE: like the PyTorch reference, degenerate (zero-area) real boxes would give
    # 0/0 here; the pad boxes are non-degenerate so padding never produces NaN.
    area_p = (px1 - px0) * (py1 - py0)                             # (TP, 1)
    area_t = (tx1 - tx0) * (ty1 - ty0)                             # (1, TP)

    iw = jnp.maximum(jnp.minimum(px1, tx1) - jnp.maximum(px0, tx0), 0.0)
    ih = jnp.maximum(jnp.minimum(py1, ty1) - jnp.maximum(py0, ty0), 0.0)
    inter = iw * ih                                                # (TP, TP)
    union = area_p + area_t - inter
    inv_union = pl.reciprocal(union, approx=True)                  # EUP slot
    iou = inter * inv_union

    ew = jnp.maximum(jnp.maximum(px1, tx1) - jnp.minimum(px0, tx0), 0.0)
    eh = jnp.maximum(jnp.maximum(py1, ty1) - jnp.minimum(py0, ty0), 0.0)
    earea = ew * eh
    inv_earea = pl.reciprocal(earea, approx=True)                  # EUP slot
    giou = iou - (earea - union) * inv_earea                       # (TP, TP)

    # --- cost_class = -one_hot(tgt_id)[:, tgt_id]  ==  -(labels[r] == labels[c]) --
    eq = (lab_col_ref[...] == lab_row_ref[...]).astype(jnp.float32)  # (TP, TP)

    # C = w_bbox * cost_bbox + w_class * (-eq) + w_giou * (-giou)
    c_ref[...] = w_bbox * cost_bbox - w_class * eq - w_giou * giou


# ----------------------------------------------------------------------------------
# Cached builder: one compile per (batch, bucket, weights)
# ----------------------------------------------------------------------------------
@functools.lru_cache(maxsize=None)
def _build_cost_fn(B: int, TP: int, w_class: float, w_bbox: float, w_giou: float):
    kernel = functools.partial(_cost_kernel,
                               w_class=w_class, w_bbox=w_bbox, w_giou=w_giou)
    fn = pl.pallas_call(
        kernel,
        out_shape=jax.ShapeDtypeStruct((B, TP, TP), jnp.float32),
        grid=(B,),
        in_specs=[
            pl.BlockSpec((None, TP, 4), lambda b: (b, 0, 0)),   # pred boxes
            pl.BlockSpec((None, 4, TP), lambda b: (b, 0, 0)),   # target boxes (T)
            pl.BlockSpec((None, TP, 1), lambda b: (b, 0, 0)),   # labels as column
            pl.BlockSpec((None, 1, TP), lambda b: (b, 0, 0)),   # labels as row
        ],
        out_specs=pl.BlockSpec((None, TP, TP), lambda b: (b, 0, 0)),
        compiler_params=pltpu.CompilerParams(
            dimension_semantics=("parallel",)),                  # 2x on v7x megacore
    )
    return jax.jit(fn)


def _bucket_size(t: int) -> int:
    """Fixed lane-dense bucket: smallest multiple of 128 that fits all targets."""
    return max(128, ((int(t) + 127) // 128) * 128)


def _pad_boxes(b, TP):
    b = jnp.asarray(b, jnp.float32)
    n = int(b.shape[0])
    if TP > n:
        pad = jnp.tile(jnp.asarray(_DUMMY_BOX)[None, :], (TP - n, 1))
        b = jnp.concatenate([b, pad], axis=0)
    return b


def _pad_labels(l, TP):
    l = jnp.asarray(l, jnp.int32)
    n = int(l.shape[0])
    if TP > n:
        l = jnp.concatenate([l, jnp.full((TP - n,), -1, jnp.int32)])
    return l


def compute_cost_matrices(pred_boxes, targets, cost_class, cost_bbox, cost_giou):
    """Single batched pallas_call producing (B, TP, TP) cost matrices (padded)."""
    B = len(targets)
    box_nums = [int(v['labels'].shape[0]) for v in targets]
    TP = _bucket_size(max(box_nums))

    preds, tgts_t, lcols, lrows = [], [], [], []
    for i, v in enumerate(targets):
        T = box_nums[i]
        preds.append(_pad_boxes(pred_boxes[i, :T], TP))          # (TP, 4)
        t = _pad_boxes(v['boxes'], TP)                           # (TP, 4)
        tgts_t.append(t.T)                                       # (4, TP)
        lab = _pad_labels(v['labels'], TP)                       # (TP,)
        lcols.append(lab.reshape(TP, 1))
        lrows.append(lab.reshape(1, TP))

    P = jnp.stack(preds)      # (B, TP, 4)
    Tt = jnp.stack(tgts_t)    # (B, 4, TP)
    Lc = jnp.stack(lcols)     # (B, TP, 1)
    Lr = jnp.stack(lrows)     # (B, 1, TP)

    fn = _build_cost_fn(B, TP, float(cost_class), float(cost_bbox), float(cost_giou))
    C = fn(P, Tt, Lc, Lr)     # (B, TP, TP)
    return C, box_nums, TP


# ----------------------------------------------------------------------------------
# Host-side Hungarian assignment (exact, O(n^3) shortest-augmenting-path).
# TODO(synk): linear_sum_assignment is a sequential combinatorial algorithm with no
#             Pallas equivalent; it runs on the host (numpy), like the original .cpu().
# ----------------------------------------------------------------------------------
def _hungarian(cost):
    cost = np.asarray(cost, dtype=np.float64)
    n = cost.shape[0]
    u = np.zeros(n + 1)
    v = np.zeros(n + 1)
    p = np.zeros(n + 1, dtype=np.int64)      # p[j]: row (1-indexed) matched to column j
    way = np.zeros(n + 1, dtype=np.int64)
    for i in range(1, n + 1):
        p[0] = i
        j0 = 0
        minv = np.full(n + 1, np.inf)
        used = np.zeros(n + 1, dtype=bool)
        while True:
            used[j0] = True
            i0 = p[j0]
            delta = np.inf
            j1 = 0
            for j in range(1, n + 1):
                if not used[j]:
                    cur = cost[i0 - 1, j - 1] - u[i0] - v[j]
                    if cur < minv[j]:
                        minv[j] = cur
                        way[j] = j0
                    if minv[j] < delta:
                        delta = minv[j]
                        j1 = j
            for j in range(n + 1):
                if used[j]:
                    u[p[j]] += delta
                    v[j] -= delta
                else:
                    minv[j] -= delta
            j0 = j1
            if p[j0] == 0:
                break
        while True:
            j1 = way[j0]
            p[j0] = p[j1]
            j0 = j1
            if j0 == 0:
                break
    col_of_row = np.zeros(n, dtype=np.int64)
    for j in range(1, n + 1):
        col_of_row[p[j] - 1] = j - 1
    return np.arange(n, dtype=np.int64), col_of_row


# ----------------------------------------------------------------------------------
# Module
# ----------------------------------------------------------------------------------
class HungarianMatcherClass:
    """JAX/Pallas port of the PyTorch HungarianMatcherClass."""

    def __init__(self, cost_class: float = 100, cost_bbox: float = 1,
                 cost_giou: float = 1, class_num: int = 81):
        self.cost_class = cost_class
        self.cost_bbox = cost_bbox
        self.cost_giou = cost_giou
        self.class_num = class_num
        assert cost_bbox != 0 or cost_giou != 0, 'all costs cant be 0'

    def __call__(self, outputs, targets):
        if len(targets) == 0:
            return []
        # One batched kernel launch for all images, then a single device->host copy.
        C, box_nums, _ = compute_cost_matrices(
            outputs['pred_boxes'], targets,
            self.cost_class, self.cost_bbox, self.cost_giou)
        C_host = np.asarray(jax.device_get(jax.block_until_ready(C)))

        indices = []
        for i, T in enumerate(box_nums):
            r, c = _hungarian(C_host[i, :T, :T])
            indices.append((np.asarray(r, dtype=np.int64),
                            np.asarray(c, dtype=np.int64)))
        return indices


# ----------------------------------------------------------------------------------
# Pure numpy reference of the cost matrix (for correctness check)
# ----------------------------------------------------------------------------------
def _ref_cost_matrix(pred_box, tgt_box, labels, wc, wb, wg):
    p = np.asarray(pred_box, np.float64)
    t = np.asarray(tgt_box, np.float64)
    lab = np.asarray(labels)
    cost_bbox = np.abs(p[:, None, :] - t[None, :, :]).sum(-1)

    def to_xyxy(b):
        cx, cy, w, h = b[:, 0], b[:, 1], b[:, 2], b[:, 3]
        return np.stack([cx - 0.5 * w, cy - 0.5 * h, cx + 0.5 * w, cy + 0.5 * h], -1)

    a = to_xyxy(p)
    b = to_xyxy(t)
    area_a = (a[:, 2] - a[:, 0]) * (a[:, 3] - a[:, 1])
    area_b = (b[:, 2] - b[:, 0]) * (b[:, 3] - b[:, 1])
    lt = np.maximum(a[:, None, :2], b[None, :, :2])
    rb = np.minimum(a[:, None, 2:], b[None, :, 2:])
    wh = np.clip(rb - lt, 0, None)
    inter = wh[..., 0] * wh[..., 1]
    union = area_a[:, None] + area_b[None, :] - inter
    iou = inter / union
    elt = np.minimum(a[:, None, :2], b[None, :, :2])
    erb = np.maximum(a[:, None, 2:], b[None, :, 2:])
    ewh = np.clip(erb - elt, 0, None)
    earea = ewh[..., 0] * ewh[..., 1]
    giou = iou - (earea - union) / earea
    cost_class = -(lab[:, None] == lab[None, :]).astype(np.float64)
    return wb * cost_bbox + wc * cost_class + wg * (-giou)


if __name__ == "__main__":
    key = jax.random.PRNGKey(0)
    B, Q, NUM_CLASSES = 2, 16, 81

    k1, k2, k3 = jax.random.split(key, 3)
    pred_logits = jax.random.normal(k1, (B, Q, NUM_CLASSES), dtype=jnp.float32)  # unused (matches reference)
    cxy = jax.random.uniform(k2, (B, Q, 2), minval=0.1, maxval=0.9)
    wh = jax.random.uniform(k3, (B, Q, 2), minval=0.05, maxval=0.4)
    pred_boxes = jnp.concatenate([cxy, wh], axis=-1).astype(jnp.float32)

    target_counts = [5, 7]
    targets = []
    for i, tnum in enumerate(target_counts):
        lk, bk1, bk2 = jax.random.split(jax.random.fold_in(jax.random.PRNGKey(1), i), 3)
        labels = jax.random.randint(lk, (tnum,), 0, NUM_CLASSES, dtype=jnp.int32)
        tcxy = jax.random.uniform(bk1, (tnum, 2), minval=0.1, maxval=0.9)
        twh = jax.random.uniform(bk2, (tnum, 2), minval=0.05, maxval=0.4)
        boxes = jnp.concatenate([tcxy, twh], axis=-1).astype(jnp.float32)
        targets.append({"labels": labels, "boxes": boxes})

    outputs = {"pred_logits": pred_logits, "pred_boxes": pred_boxes}

    matcher = HungarianMatcherClass(cost_class=100, cost_bbox=1, cost_giou=1,
                                    class_num=NUM_CLASSES)

    # run: one batched Pallas cost kernel + single device_get + host Hungarian
    indices = matcher(outputs, targets)

    # correctness check of the batched Pallas cost matrices vs a pure numpy reference
    C_dev, box_nums, TP = compute_cost_matrices(
        outputs['pred_boxes'], targets,
        matcher.cost_class, matcher.cost_bbox, matcher.cost_giou)
    C_all = np.asarray(jax.device_get(jax.block_until_ready(C_dev)))

    for i, v in enumerate(targets):
        T = box_nums[i]
        out_bbox = outputs["pred_boxes"][i, :T]
        C_kernel = C_all[i, :T, :T]
        C_ref = _ref_cost_matrix(out_bbox, v["boxes"], v["labels"],
                                 matcher.cost_class, matcher.cost_bbox,
                                 matcher.cost_giou)
        # tolerance loosened because of the approx (EUP) reciprocals in the kernel
        np.testing.assert_allclose(C_kernel, C_ref, rtol=1e-2, atol=1e-2)

        ri, ci = indices[i]
        assert ri.shape == ci.shape == (T,)
        assert np.array_equal(ri, np.arange(T))
        assert np.array_equal(np.sort(ci), np.arange(T))   # valid permutation

    print("KERNEL_OK")
</pallas_src>

<mosaic_0001>
module attributes {stable_mosaic.version = 11 : i64} {
  func.func @_cost_kernel(%arg0: i32, %arg1: memref<1x128x4xf32, #tpu.memory_space<vmem>>, %arg2: memref<1x4x128xf32, #tpu.memory_space<vmem>>, %arg3: memref<1x128x1xi32, #tpu.memory_space<vmem>>, %arg4: memref<1x1x128xi32, #tpu.memory_space<vmem>>, %arg5: memref<1x128x128xf32, #tpu.memory_space<vmem>>) attributes {dimension_semantics = [#tpu.dimension_semantics<parallel>], iteration_bounds = array<i64: 2>, scalar_prefetch = 0 : i64, scratch_operands = 0 : i64, tpu.core_type = #tpu.core_type<tc>, window_params = [{transform_indices = @transform_0, window_bounds = array<i64: 1, 128, 4>}, {transform_indices = @transform_1, window_bounds = array<i64: 1, 4, 128>}, {transform_indices = @transform_2, window_bounds = array<i64: 1, 128, 1>}, {transform_indices = @transform_3, window_bounds = array<i64: 1, 1, 128>}, {transform_indices = @transform_4, window_bounds = array<i64: 1, 128, 128>}]} {
    %c0 = arith.constant 0 : index
    %c0_0 = arith.constant 0 : index
    %c0_1 = arith.constant 0 : index
    %0 = vector.load %arg1[%c0, %c0_0, %c0_1] : memref<1x128x4xf32, #tpu.memory_space<vmem>>, vector<1x128x4xf32>
    %1 = vector.shape_cast %0 : vector<1x128x4xf32> to vector<128x4xf32>
    %c0_2 = arith.constant 0 : index
    %c0_3 = arith.constant 0 : index
    %c0_4 = arith.constant 0 : index
    %2 = vector.load %arg2[%c0_2, %c0_3, %c0_4] : memref<1x4x128xf32, #tpu.memory_space<vmem>>, vector<1x4x128xf32>
    %3 = vector.shape_cast %2 : vector<1x4x128xf32> to vector<4x128xf32>
    %4 = vector.extract_strided_slice %1 {offsets = [0, 0], sizes = [128, 1], strides = [1, 1]} : vector<128x4xf32> to vector<128x1xf32>
    %5 = vector.extract_strided_slice %1 {offsets = [0, 1], sizes = [128, 1], strides = [1, 1]} : vector<128x4xf32> to vector<128x1xf32>
    %6 = vector.extract_strided_slice %1 {offsets = [0, 2], sizes = [128, 1], strides = [1, 1]} : vector<128x4xf32> to vector<128x1xf32>
    %7 = vector.extract_strided_slice %1 {offsets = [0, 3], sizes = [128, 1], strides = [1, 1]} : vector<128x4xf32> to vector<128x1xf32>
    %8 = vector.extract_strided_slice %3 {offsets = [0, 0], sizes = [1, 128], strides = [1, 1]} : vector<4x128xf32> to vector<1x128xf32>
    %9 = vector.extract_strided_slice %3 {offsets = [1, 0], sizes = [1, 128], strides = [1, 1]} : vector<4x128xf32> to vector<1x128xf32>
    %10 = vector.extract_strided_slice %3 {offsets = [2, 0], sizes = [1, 128], strides = [1, 1]} : vector<4x128xf32> to vector<1x128xf32>
    %11 = vector.extract_strided_slice %3 {offsets = [3, 0], sizes = [1, 128], strides = [1, 1]} : vector<4x128xf32> to vector<1x128xf32>
    %12 = vector.broadcast %4 : vector<128x1xf32> to vector<128x128xf32>
    %13 = vector.broadcast %8 : vector<1x128xf32> to vector<128x128xf32>
    %14 = arith.subf %12, %13 : vector<128x128xf32>
    %15 = math.absf %14 : vector<128x128xf32>
    %16 = vector.broadcast %5 : vector<128x1xf32> to vector<128x128xf32>
    %17 = vector.broadcast %9 : vector<1x128xf32> to vector<128x128xf32>
    %18 = arith.subf %16, %17 : vector<128x128xf32>
    %19 = math.absf %18 : vector<128x128xf32>
    %20 = arith.addf %15, %19 : vector<128x128xf32>
    %21 = vector.broadcast %6 : vector<128x1xf32> to vector<128x128xf32>
    %22 = vector.broadcast %10 : vector<1x128xf32> to vector<128x128xf32>
    %23 = arith.subf %21, %22 : vector<128x128xf32>
    %24 = math.absf %23 : vector<128x128xf32>
    %25 = arith.addf %20, %24 : vector<128x128xf32>
    %26 = vector.broadcast %7 : vector<128x1xf32> to vector<128x128xf32>
    %27 = vector.broadcast %11 : vector<1x128xf32> to vector<128x128xf32>
    %28 = arith.subf %26, %27 : vector<128x128xf32>
    %29 = math.absf %28 : vector<128x128xf32>
    %30 = arith.addf %25, %29 : vector<128x128xf32>
    %cst = arith.constant 5.000000e-01 : f32
    %31 = vector.broadcast %cst : f32 to vector<128x1xf32>
    %32 = arith.mulf %31, %6 : vector<128x1xf32>
    %33 = arith.subf %4, %32 : vector<128x1xf32>
    %cst_5 = arith.constant 5.000000e-01 : f32
    %34 = vector.broadcast %cst_5 : f32 to vector<128x1xf32>
    %35 = arith.mulf %34, %7 : vector<128x1xf32>
    %36 = arith.subf %5, %35 : vector<128x1xf32>
    %cst_6 = arith.constant 5.000000e-01 : f32
    %37 = vector.broadcast %cst_6 : f32 to vector<128x1xf32>
    %38 = arith.mulf %37, %6 : vector<128x1xf32>
    %39 = arith.addf %4, %38 : vector<128x1xf32>
    %cst_7 = arith.constant 5.000000e-01 : f32
    %40 = vector.broadcast %cst_7 : f32 to vector<128x1xf32>
    %41 = arith.mulf %40, %7 : vector<128x1xf32>
    %42 = arith.addf %5, %41 : vector<128x1xf32>
    %cst_8 = arith.constant 5.000000e-01 : f32
    %43 = vector.broadcast %cst_8 : f32 to vector<1x128xf32>
    %44 = arith.mulf %43, %10 : vector<1x128xf32>
    %45 = arith.subf %8, %44 : vector<1x128xf32>
    %cst_9 = arith.constant 5.000000e-01 : f32
    %46 = vector.broadcast %cst_9 : f32 to vector<1x128xf32>
    %47 = arith.mulf %46, %11 : vector<1x128xf32>
    %48 = arith.subf %9, %47 : vector<1x128xf32>
    %cst_10 = arith.constant 5.000000e-01 : f32
    %49 = vector.broadcast %cst_10 : f32 to vector<1x128xf32>
    %50 = arith.mulf %49, %10 : vector<1x128xf32>
    %51 = arith.addf %8, %50 : vector<1x128xf32>
    %cst_11 = arith.constant 5.000000e-01 : f32
    %52 = vector.broadcast %cst_11 : f32 to vector<1x128xf32>
    %53 = arith.mulf %52, %11 : vector<1x128xf32>
    %54 = arith.addf %9, %53 : vector<1x128xf32>
    %55 = arith.subf %39, %33 : vector<128x1xf32>
    %56 = arith.subf %42, %36 : vector<128x1xf32>
    %57 = arith.mulf %55, %56 : vector<128x1xf32>
    %58 = arith.subf %51, %45 : vector<1x128xf32>
    %59 = arith.subf %54, %48 : vector<1x128xf32>
    %60 = arith.mulf %58, %59 : vector<1x128xf32>
    %61 = vector.broadcast %39 : vector<128x1xf32> to vector<128x128xf32>
    %62 = vector.broadcast %51 : vector<1x128xf32> to vector<128x128xf32>
    %63 = arith.minimumf %61, %62 : vector<128x128xf32>
    %64 = vector.broadcast %33 : vector<128x1xf32> to vector<128x128xf32>
    %65 = vector.broadcast %45 : vector<1x128xf32> to vector<128x128xf32>
    %66 = arith.maximumf %64, %65 : vector<128x128xf32>
    %67 = arith.subf %63, %66 : vector<128x128xf32>
    %cst_12 = arith.constant 0.000000e+00 : f32
    %68 = vector.broadcast %cst_12 : f32 to vector<128x128xf32>
    %69 = arith.maximumf %67, %68 : vector<128x128xf32>
    %70 = vector.broadcast %42 : vector<128x1xf32> to vector<128x128xf32>
    %71 = vector.broadcast %54 : vector<1x128xf32> to vector<128x128xf32>
    %72 = arith.minimumf %70, %71 : vector<128x128xf32>
    %73 = vector.broadcast %36 : vector<128x1xf32> to vector<128x128xf32>
    %74 = vector.broadcast %48 : vector<1x128xf32> to vector<128x128xf32>
    %75 = arith.maximumf %73, %74 : vector<128x128xf32>
    %76 = arith.subf %72, %75 : vector<128x128xf32>
    %cst_13 = arith.constant 0.000000e+00 : f32
    %77 = vector.broadcast %cst_13 : f32 to vector<128x128xf32>
    %78 = arith.maximumf %76, %77 : vector<128x128xf32>
    %79 = arith.mulf %69, %78 : vector<128x128xf32>
    %80 = vector.broadcast %57 : vector<128x1xf32> to vector<128x128xf32>
    %81 = vector.broadcast %60 : vector<1x128xf32> to vector<128x128xf32>
    %82 = arith.addf %80, %81 : vector<128x128xf32>
    %83 = arith.subf %82, %79 : vector<128x128xf32>
    %84 = tpu.reciprocal %83 {approx = true} : vector<128x128xf32> -> vector<128x128xf32>
    %85 = arith.mulf %79, %84 : vector<128x128xf32>
    %86 = vector.broadcast %39 : vector<128x1xf32> to vector<128x128xf32>
    %87 = vector.broadcast %51 : vector<1x128xf32> to vector<128x128xf32>
    %88 = arith.maximumf %86, %87 : vector<128x128xf32>
    %89 = vector.broadcast %33 : vector<128x1xf32> to vector<128x128xf32>
    %90 = vector.broadcast %45 : vector<1x128xf32> to vector<128x128xf32>
    %91 = arith.minimumf %89, %90 : vector<128x128xf32>
    %92 = arith.subf %88, %91 : vector<128x128xf32>
    %cst_14 = arith.constant 0.000000e+00 : f32
    %93 = vector.broadcast %cst_14 : f32 to vector<128x128xf32>
    %94 = arith.maximumf %92, %93 : vector<128x128xf32>
    %95 = vector.broadcast %42 : vector<128x1xf32> to vector<128x128xf32>
    %96 = vector.broadcast %54 : vector<1x128xf32> to vector<128x128xf32>
    %97 = arith.maximumf %95, %96 : vector<128x128xf32>
    %98 = vector.broadcast %36 : vector<128x1xf32> to vector<128x128xf32>
    %99 = vector.broadcast %48 : vector<1x128xf32> to vector<128x128xf32>
    %100 = arith.minimumf %98, %99 : vector<128x128xf32>
    %101 = arith.subf %97, %100 : vector<128x128xf32>
    %cst_15 = arith.constant 0.000000e+00 : f32
    %102 = vector.broadcast %cst_15 : f32 to vector<128x128xf32>
    %103 = arith.maximumf %101, %102 : vector<128x128xf32>
    %104 = arith.mulf %94, %103 : vector<128x128xf32>
    %105 = tpu.reciprocal %104 {approx = true} : vector<128x128xf32> -> vector<128x128xf32>
    %106 = arith.subf %104, %83 : vector<128x128xf32>
    %107 = arith.mulf %106, %105 : vector<128x128xf32>
    %108 = arith.subf %85, %107 : vector<128x128xf32>
    %c0_16 = arith.constant 0 : index
    %c0_17 = arith.constant 0 : index
    %c0_18 = arith.constant 0 : index
    %109 = vector.load %arg3[%c0_16, %c0_17, %c0_18] : memref<1x128x1xi32, #tpu.memory_space<vmem>>, vector<1x128x1xi32>
    %110 = vector.shape_cast %109 : vector<1x128x1xi32> to vector<128x1xi32>
    %c0_19 = arith.constant 0 : index
    %c0_20 = arith.constant 0 : index
    %c0_21 = arith.constant 0 : index
    %111 = vector.load %arg4[%c0_19, %c0_20, %c0_21] : memref<1x1x128xi32, #tpu.memory_space<vmem>>, vector<1x1x128xi32>
    %112 = vector.shape_cast %111 : vector<1x1x128xi32> to vector<1x128xi32>
    %113 = vector.broadcast %110 : vector<128x1xi32> to vector<128x128xi32>
    %114 = vector.broadcast %112 : vector<1x128xi32> to vector<128x128xi32>
    %115 = arith.cmpi eq, %113, %114 : vector<128x128xi32>
    %116 = arith.extui %115 : vector<128x128xi1> to vector<128x128xi32>
    %117 = arith.sitofp %116 : vector<128x128xi32> to vector<128x128xf32>
    %cst_22 = arith.constant 1.000000e+00 : f32
    %118 = vector.broadcast %cst_22 : f32 to vector<128x128xf32>
    %119 = arith.mulf %118, %30 : vector<128x128xf32>
    %cst_23 = arith.constant 1.000000e+02 : f32
    %120 = vector.broadcast %cst_23 : f32 to vector<128x128xf32>
    %121 = arith.mulf %120, %117 : vector<128x128xf32>
    %122 = arith.subf %119, %121 : vector<128x128xf32>
    %cst_24 = arith.constant 1.000000e+00 : f32
    %123 = vector.broadcast %cst_24 : f32 to vector<128x128xf32>
    %124 = arith.mulf %123, %108 : vector<128x128xf32>
    %125 = arith.subf %122, %124 : vector<128x128xf32>
    %c0_25 = arith.constant 0 : index
    %c0_26 = arith.constant 0 : index
    %c0_27 = arith.constant 0 : index
    %126 = vector.load %arg5[%c0_25, %c0_26, %c0_27] : memref<1x128x128xf32, #tpu.memory_space<vmem>>, vector<1x128x128xf32>
    %127 = vector.shape_cast %126 : vector<1x128x128xf32> to vector<128x128xf32>
    %128 = vector.shape_cast %125 : vector<128x128xf32> to vector<1x128x128xf32>
    tpu.vector_store %arg5[%c0_25, %c0_26, %c0_27], %128 {strides = array<i32>} : memref<1x128x128xf32, #tpu.memory_space<vmem>>, vector<1x128x128xf32>,
    return
  }
  func.func @transform_0(%arg0: i32) -> (i32, i32, i32) {
    %c0_i32 = arith.constant 0 : i32
    %c0_i32_0 = arith.constant 0 : i32
    %c0_i32_1 = arith.constant 0 : i32
    return %arg0, %c0_i32, %c0_i32_0 : i32, i32, i32
  }
  func.func @transform_1(%arg0: i32) -> (i32, i32, i32) {
    %c0_i32 = arith.constant 0 : i32
    %c0_i32_0 = arith.constant 0 : i32
    %c0_i32_1 = arith.constant 0 : i32
    return %arg0, %c0_i32, %c0_i32_0 : i32, i32, i32
  }
  func.func @transform_2(%arg0: i32) -> (i32, i32, i32) {
    %c0_i32 = arith.constant 0 : i32
    %c0_i32_0 = arith.constant 0 : i32
    %c0_i32_1 = arith.constant 0 : i32
    return %arg0, %c0_i32, %c0_i32_0 : i32, i32, i32
  }
  func.func @transform_3(%arg0: i32) -> (i32, i32, i32) {
    %c0_i32 = arith.constant 0 : i32
    %c0_i32_0 = arith.constant 0 : i32
    %c0_i32_1 = arith.constant 0 : i32
    return %arg0, %c0_i32, %c0_i32_0 : i32, i32, i32
  }
  func.func @transform_4(%arg0: i32) -> (i32, i32, i32) {
    %c0_i32 = arith.constant 0 : i32
    %c0_i32_0 = arith.constant 0 : i32
    %c0_i32_1 = arith.constant 0 : i32
    return %arg0, %c0_i32, %c0_i32_0 : i32, i32, i32
  }
}

</mosaic_0001>

<llo_original>
// kernel: tpu_custom_call.1
$region0: #{tpu_custom_call.1}
  #allocation0 [shape = 'u32[]', space=smem, size = 0x4, offset = 0x4, fixed_abs, tag = 'smem constant byte address 0x4 - core index']
  #allocation1 [shape = 'u32[144,128]{1,0:T(1,128)}', space=vmem, size = 0x12000, scoped, tag = 'internal scratch']
  %s0 = inlined_call_operand.vmem [shape: f32[2,128,4], index: 0, kind: input, shape index: {}]
  %s1 = inlined_call_operand.vmem [shape: f32[2,4,128], index: 1, kind: input, shape index: {}]
  %s2 = inlined_call_operand.vmem [shape: s32[2,128,1], index: 2, kind: input, shape index: {}]
  %s3 = inlined_call_operand.vmem [shape: s32[2,1,128], index: 3, kind: input, shape index: {}]
  %s4 = inlined_call_operand.hbm [shape: f32[2,128,128], index: 4, kind: output, shape index: {}]
  %s5 = sld [smem:[#allocation0]]
  $region49: #{tpu_custom_call.1} parent=0
    _
  %s7 = ssub.s32 1, %s5
  %s8 = scalar_select 0, %s7, %s5
  $region1: #{tpu_custom_call.1} parent=0
    #allocation2 [shape = 'u8[131072]{0}', space=vmem, size = 0x20000, scoped, tag = 'output window, operand 0']
    #allocation3 [shape = 's32[2]{0}', space=sflag, size = 0x8, scoped, tag = 'scoped memory for tpu_custom_call.1']
    %9 = vsyncpa [#allocation3], 0
    %s10 = scalar_lea.sflag [#allocation3], 1
    %11 = vsyncpa %s10, 0
    loop: start=0, step=1, limit=4
    $region2: #{tpu_custom_call.1} parent=1 // loop_pre_header
      _
    $region3: #{tpu_custom_call.1} parent=1 // loop_header
      %s13 = sphi 0, %s17
      %p14 = scmp.ge.s32.totalorder %s13, 4
      %s23 = sphi 0, %s25
      %s26 = sphi 0, %s23
      %s27 = sphi 0, %s26
      %s43 = sphi 0, %s27
      %s49 = sphi 0, %s51
      %s52 = sphi 0, %s49
      %s53 = sphi 0, %s52
      %s69 = sphi 0, %s53
      %s75 = sphi 0, %s77
      %s78 = sphi 0, %s75
      %s79 = sphi 0, %s78
      %s95 = sphi 0, %s79
      %s101 = sphi 0, %s103
      %s104 = sphi 0, %s101
      %s105 = sphi 0, %s104
      %s121 = sphi 0, %s105
      %s127 = sphi 0, %s129
      %s130 = sphi 0, %s127
      %s131 = sphi 0, %s130
      %s147 = sphi 0, %s131
    $region4: #{tpu_custom_call.1} parent=1 // loop_header_branch
      %16 = sbr.rel (%p14) target = $region8
    $region5: #{tpu_custom_call.1} parent=1 // loop_body
      %s18 = ssub.s32 %s13, 1
      %s19 = ssub.s32 %s13, 2
      %s20 = sadd.s32 %s13, 1
      %s21 = ssub.s32 %s13, %s20
      %p22 = scmp.eq.s32.totalorder %s21, 0
      %s24 = sadd.s32 %s23, 1
      %s25 = scalar_select %p22, %s23, %s24
      %p28 = pneg %p22
      %p29 = scmp.eq.s32.totalorder %s13, 1
      %p30 = por %p28, %p29
      %p31 = scmp.ne.s32.totalorder %s23, %s26
      %p32 = scmp.eq.s32.totalorder %s13, 0
      %p33 = por %p31, %p32
      %p34 = scmp.ne.s32.totalorder %s23, %s26
      %p35 = scmp.eq.s32.totalorder %s18, 1
      %p36 = por %p34, %p35
      %p37 = scmp.ne.s32.totalorder %s26, %s27
      %p38 = scmp.eq.s32.totalorder %s18, 0
      %p39 = por %p37, %p38
      %p40 = scmp.ne.s32.totalorder %s26, %s27
      %p41 = scmp.eq.s32.totalorder %s19, 1
      %p42 = por %p40, %p41
      %p44 = scmp.ne.s32.totalorder %s27, %s43
      %p45 = scmp.eq.s32.totalorder %s19, 0
      %p46 = por %p44, %p45
      %s47 = ssub.s32 %s13, %s20
      %p48 = scmp.eq.s32.totalorder %s47, 0
      %s50 = sadd.s32 %s49, 1
      %s51 = scalar_select %p48, %s49, %s50
      %p54 = pneg %p48
      %p55 = scmp.eq.s32.totalorder %s13, 1
      %p56 = por %p54, %p55
      %p57 = scmp.ne.s32.totalorder %s49, %s52
      %p58 = scmp.eq.s32.totalorder %s13, 0
      %p59 = por %p57, %p58
      %p60 = scmp.ne.s32.totalorder %s49, %s52
      %p61 = scmp.eq.s32.totalorder %s18, 1
      %p62 = por %p60, %p61
      %p63 = scmp.ne.s32.totalorder %s52, %s53
      %p64 = scmp.eq.s32.totalorder %s18, 0
      %p65 = por %p63, %p64
      %p66 = scmp.ne.s32.totalorder %s52, %s53
      %p67 = scmp.eq.s32.totalorder %s19, 1
      %p68 = por %p66, %p67
      %p70 = scmp.ne.s32.totalorder %s53, %s69
      %p71 = scmp.eq.s32.totalorder %s19, 0
      %p72 = por %p70, %p71
      %s73 = ssub.s32 %s13, %s20
      %p74 = scmp.eq.s32.totalorder %s73, 0
      %s76 = sadd.s32 %s75, 1
      %s77 = scalar_select %p74, %s75, %s76
      %p80 = pneg %p74
      %p81 = scmp.eq.s32.totalorder %s13, 1
      %p82 = por %p80, %p81
      %p83 = scmp.ne.s32.totalorder %s75, %s78
      %p84 = scmp.eq.s32.totalorder %s13, 0
      %p85 = por %p83, %p84
      %p86 = scmp.ne.s32.totalorder %s75, %s78
      %p87 = scmp.eq.s32.totalorder %s18, 1
      %p88 = por %p86, %p87
      %p89 = scmp.ne.s32.totalorder %s78, %s79
      %p90 = scmp.eq.s32.totalorder %s18, 0
      %p91 = por %p89, %p90
      %p92 = scmp.ne.s32.totalorder %s78, %s79
      %p93 = scmp.eq.s32.totalorder %s19, 1
      %p94 = por %p92, %p93
      %p96 = scmp.ne.s32.totalorder %s79, %s95
      %p97 = scmp.eq.s32.totalorder %s19, 0
      %p98 = por %p96, %p97
      %s99 = ssub.s32 %s13, %s20
      %p100 = scmp.eq.s32.totalorder %s99, 0
      %s102 = sadd.s32 %s101, 1
      %s103 = scalar_select %p100, %s101, %s102
      %p106 = pneg %p100
      %p107 = scmp.eq.s32.totalorder %s13, 1
      %p108 = por %p106, %p107
      %p109 = scmp.ne.s32.totalorder %s101, %s104
      %p110 = scmp.eq.s32.totalorder %s13, 0
      %p111 = por %p109, %p110
      %p112 = scmp.ne.s32.totalorder %s101, %s104
      %p113 = scmp.eq.s32.totalorder %s18, 1
      %p114 = por %p112, %p113
      %p115 = scmp.ne.s32.totalorder %s104, %s105
      %p116 = scmp.eq.s32.totalorder %s18, 0
      %p117 = por %p115, %p116
      %p118 = scmp.ne.s32.totalorder %s104, %s105
      %p119 = scmp.eq.s32.totalorder %s19, 1
      %p120 = por %p118, %p119
      %p122 = scmp.ne.s32.totalorder %s105, %s121
      %p123 = scmp.eq.s32.totalorder %s19, 0
      %p124 = por %p122, %p123
      %s125 = ssub.s32 %s13, %s20
      %p126 = scmp.eq.s32.totalorder %s125, 0
      %s128 = sadd.s32 %s127, 1
      %s129 = scalar_select %p126, %s127, %s128
      %p132 = pneg %p126
      %p133 = scmp.eq.s32.totalorder %s13, 1
      %p134 = por %p132, %p133
      %p135 = scmp.ne.s32.totalorder %s127, %s130
      %p136 = scmp.eq.s32.totalorder %s13, 0
      %p137 = por %p135, %p136
      %p138 = scmp.ne.s32.totalorder %s127, %s130
      %p139 = scmp.eq.s32.totalorder %s18, 1
      %p140 = por %p138, %p139
      %p141 = scmp.ne.s32.totalorder %s130, %s131
      %p142 = scmp.eq.s32.totalorder %s18, 0
      %p143 = por %p141, %p142
      %p144 = scmp.ne.s32.totalorder %s130, %s131
      %p145 = scmp.eq.s32.totalorder %s19, 1
      %p146 = por %p144, %p145
      %p148 = scmp.ne.s32.totalorder %s131, %s147
      %p149 = scmp.eq.s32.totalorder %s19, 0
      %p150 = por %p148, %p149
      %p151 = scmp.le.s32.totalorder 1, %s13
      %p152 = scmp.lt.s32.totalorder %s13, 3
      %p153 = pnand %p151, %p152
      %p154 = pneg %p153
      // Predicated region
      $region9: #{tpu_custom_call.1} parent=5 // pred_check
        _
      $region10: #{tpu_custom_call.1} parent=5 // pred_check_branch
        %156 = sbr.rel (%p153) target = $region12
      $region11: #{tpu_custom_call.1} parent=5 // pred_region
        %s157 = ssub.s32 %s13, 1
      $region12: #{tpu_custom_call.1} parent=5 // pred_fallthru
        _
      %p158 = scmp.lt.s32.totalorder %s13, 2
      // Predicated region
      $region13: #{tpu_custom_call.1} parent=5 // pred_check
        %p159 = pneg %p158
      $region14: #{tpu_custom_call.1} parent=5 // pred_check_branch
        %161 = sbr.rel (%p159) target = $region16
      $region15: #{tpu_custom_call.1} parent=5 // pred_region
        // Predicated region
        $region17: #{tpu_custom_call.1} parent=15 // pred_check
          %p162 = pneg %p33
        $region18: #{tpu_custom_call.1} parent=15 // pred_check_branch
          %164 = sbr.rel (%p162) target = $region20
        $region19: #{tpu_custom_call.1} parent=15 // pred_region
          %p165 = scmp.lt.s32.totalorder %s13, 1
          %s166 = scalar_select %p165, %s13, 1
          %s167 = smul.addr %s166, 16
          %s168 = smul.addr %s167, 8
          %s169 = scalar_lea.vmem %s0, %s168
        $region20: #{tpu_custom_call.1} parent=15 // pred_fallthru
          _
        // Predicated region
        $region21: #{tpu_custom_call.1} parent=15 // pred_check
          %p170 = pneg %p59
        $region22: #{tpu_custom_call.1} parent=15 // pred_check_branch
          %172 = sbr.rel (%p170) target = $region24
        $region23: #{tpu_custom_call.1} parent=15 // pred_region
          %p173 = scmp.lt.s32.totalorder %s13, 1
          %s174 = scalar_select %p173, %s13, 1
          %s175 = smul.addr %s174, 4
          %s176 = scalar_lea.vmem %s1, %s175
        $region24: #{tpu_custom_call.1} parent=15 // pred_fallthru
          _
        // Predicated region
        $region25: #{tpu_custom_call.1} parent=15 // pred_check
          %p177 = pneg %p85
        $region26: #{tpu_custom_call.1} parent=15 // pred_check_branch
          %179 = sbr.rel (%p177) target = $region28
        $region27: #{tpu_custom_call.1} parent=15 // pred_region
          %p180 = scmp.lt.s32.totalorder %s13, 1
          %s181 = scalar_select %p180, %s13, 1
          %s182 = smul.addr %s181, 16
          %s183 = smul.addr %s182, 8
          %s184 = scalar_lea.vmem %s2, %s183
        $region28: #{tpu_custom_call.1} parent=15 // pred_fallthru
          _
        // Predicated region
        $region29: #{tpu_custom_call.1} parent=15 // pred_check
          %p185 = pneg %p111
        $region30: #{tpu_custom_call.1} parent=15 // pred_check_branch
          %187 = sbr.rel (%p185) target = $region32
        $region31: #{tpu_custom_call.1} parent=15 // pred_region
          %p188 = scmp.lt.s32.totalorder %s13, 1
          %s189 = scalar_select %p188, %s13, 1
          %s190 = scalar_lea.vmem %s3, %s189
        $region32: #{tpu_custom_call.1} parent=15 // pred_fallthru
          _
      $region16: #{tpu_custom_call.1} parent=5 // pred_fallthru
        _
      %p191 = scmp.le.s32.totalorder 1, %s13
      %p192 = scmp.lt.s32.totalorder %s13, 3
      %p193 = pnand %p191, %p192
      %p194 = pneg %p193
      // Predicated region
      $region33: #{tpu_custom_call.1} parent=5 // pred_check
        _
      $region34: #{tpu_custom_call.1} parent=5 // pred_check_branch
        %196 = sbr.rel (%p193) target = $region36
      $region35: #{tpu_custom_call.1} parent=5 // pred_region
        %s197 = ssub.s32 %s13, 1
        %p198 = scmp.lt.s32.totalorder %s18, 1
        %s199 = scalar_select %p198, %s18, 1
        %s200 = smul.addr %s199, 16
        %s201 = smul.addr %s200, 8
        %s202 = scalar_lea.vmem %s0, %s201
        %p203 = pneg %p39
        %p204 = pneg %p36
        %p205 = scmp.lt.s32.totalorder %s18, 1
        %s206 = scalar_select %p205, %s18, 1
        %s207 = smul.addr %s206, 4
        %s208 = scalar_lea.vmem %s1, %s207
        %p209 = pneg %p65
        %p210 = pneg %p62
        %p211 = scmp.lt.s32.totalorder %s18, 1
        %s212 = scalar_select %p211, %s18, 1
        %s213 = smul.addr %s212, 16
        %s214 = smul.addr %s213, 8
        %s215 = scalar_lea.vmem %s2, %s214
        %p216 = pneg %p91
        %p217 = pneg %p88
        %p218 = scmp.lt.s32.totalorder %s18, 1
        %s219 = scalar_select %p218, %s18, 1
        %s220 = scalar_lea.vmem %s3, %s219
        %p221 = pneg %p117
        %p222 = pneg %p114
        %p223 = pneg %p143
        %p224 = pneg %p140
        %s225 = sand.u32 %s130, 1
        %s226 = scalar_lea.sflag [#allocation3], %s225
        %s227 = sand.u32 %s130, 1
        %s228 = smul.addr %s227, 128
        %s229 = scalar_lea.vmem [#allocation2], %s228
        %p230 = scmp.lt.s32.totalorder %s18, 1
        %s231 = scalar_select %p230, %s18, 1
        %s232 = smul.addr %s231, 16
        %s233 = smul.addr %s232, 8
        %s234 = scalar_lea.vmem %s0, %s233
        %p235 = scmp.lt.s32.totalorder %s18, 1
        %s236 = scalar_select %p235, %s18, 1
        %s237 = smul.addr %s236, 4
        %s238 = scalar_lea.vmem %s1, %s237
        %p239 = scmp.lt.s32.totalorder %s18, 1
        %s240 = scalar_select %p239, %s18, 1
        %s241 = smul.addr %s240, 16
        %s242 = smul.addr %s241, 8
        %s243 = scalar_lea.vmem %s2, %s242
        %p244 = scmp.lt.s32.totalorder %s18, 1
        %s245 = scalar_select %p244, %s18, 1
        %s246 = scalar_lea.vmem %s3, %s245
        %v247 = vld [vmem:[%s234] sm:$0xff]
        %v248 = vld [vmem:[%s234 + $0x8] sm:$0xff]
        %v249 = vld [vmem:[%s234 + $0x10] sm:$0xff]
        %v250 = vld [vmem:[%s234 + $0x18] sm:$0xff]
        %v251 = vld [vmem:[%s234 + $0x20] sm:$0xff]
        %v252 = vld [vmem:[%s234 + $0x28] sm:$0xff]
        %v253 = vld [vmem:[%s234 + $0x30] sm:$0xff]
        %v254 = vld [vmem:[%s234 + $0x38] sm:$0xff]
        %v255 = vld [vmem:[%s234 + $0x40] sm:$0xff]
        %v256 = vld [vmem:[%s234 + $0x48] sm:$0xff]
        %v257 = vld [vmem:[%s234 + $0x50] sm:$0xff]
        %v258 = vld [vmem:[%s234 + $0x58] sm:$0xff]
        %v259 = vld [vmem:[%s234 + $0x60] sm:$0xff]
        %v260 = vld [vmem:[%s234 + $0x68] sm:$0xff]
        %v261 = vld [vmem:[%s234 + $0x70] sm:$0xff]
        %v262 = vld [vmem:[%s234 + $0x78] sm:$0xff]
        %v263 = vld [vmem:[%s238] sm:$0xf]
        %265 = vset.pattern.permute.xlu0 0
        %266 = vperm.xlu0 %265, %v247
        %v267 = vpop.permute.xlu0 %266
        %270 = vset.pattern.permute.xlu0 0
        %271 = vperm.xlu0 %270, %v248
        %v272 = vpop.permute.xlu0 %271
        %275 = vset.pattern.permute.xlu0 0
        %276 = vperm.xlu0 %275, %v249
        %v277 = vpop.permute.xlu0 %276
        %280 = vset.pattern.permute.xlu0 0
        %281 = vperm.xlu0 %280, %v250
        %v282 = vpop.permute.xlu0 %281
        %285 = vset.pattern.permute.xlu0 0
        %286 = vperm.xlu0 %285, %v251
        %v287 = vpop.permute.xlu0 %286
        %290 = vset.pattern.permute.xlu0 0
        %291 = vperm.xlu0 %290, %v252
        %v292 = vpop.permute.xlu0 %291
        %295 = vset.pattern.permute.xlu0 0
        %296 = vperm.xlu0 %295, %v253
        %v297 = vpop.permute.xlu0 %296
        %300 = vset.pattern.permute.xlu0 0
        %301 = vperm.xlu0 %300, %v254
        %v302 = vpop.permute.xlu0 %301
        %305 = vset.pattern.permute.xlu0 0
        %306 = vperm.xlu0 %305, %v255
        %v307 = vpop.permute.xlu0 %306
        %310 = vset.pattern.permute.xlu0 0
        %311 = vperm.xlu0 %310, %v256
        %v312 = vpop.permute.xlu0 %311
        %315 = vset.pattern.permute.xlu0 0
        %316 = vperm.xlu0 %315, %v257
        %v317 = vpop.permute.xlu0 %316
        %320 = vset.pattern.permute.xlu0 0
        %321 = vperm.xlu0 %320, %v258
        %v322 = vpop.permute.xlu0 %321
        %325 = vset.pattern.permute.xlu0 0
        %326 = vperm.xlu0 %325, %v259
        %v327 = vpop.permute.xlu0 %326
        %330 = vset.pattern.permute.xlu0 0
        %331 = vperm.xlu0 %330, %v260
        %v332 = vpop.permute.xlu0 %331
        %335 = vset.pattern.permute.xlu0 0
        %336 = vperm.xlu0 %335, %v261
        %v337 = vpop.permute.xlu0 %336
        %340 = vset.pattern.permute.xlu0 0
        %341 = vperm.xlu0 %340, %v262
        %v342 = vpop.permute.xlu0 %341
        %v344 = vlaneseq
        %v345 = vshrl.u32 %v344, 7
        %v346 = vsub.s32 0, %v345
        %v347 = vrot.slane %v263, %v346
        %v348 = vsub.f32 %v267, %v347
        %v349 = vsub.f32 %v272, %v347
        %v350 = vsub.f32 %v277, %v347
        %v351 = vsub.f32 %v282, %v347
        %v352 = vsub.f32 %v287, %v347
        %v353 = vsub.f32 %v292, %v347
        %v354 = vsub.f32 %v297, %v347
        %v355 = vsub.f32 %v302, %v347
        %v356 = vsub.f32 %v307, %v347
        %v357 = vsub.f32 %v312, %v347
        %v358 = vsub.f32 %v317, %v347
        %v359 = vsub.f32 %v322, %v347
        %v360 = vsub.f32 %v327, %v347
        %v361 = vsub.f32 %v332, %v347
        %v362 = vsub.f32 %v337, %v347
        %v363 = vsub.f32 %v342, %v347
        %v364 = vand.u32 2147483647, %v348
        %v365 = vand.u32 2147483647, %v349
        %v366 = vand.u32 2147483647, %v350
        %v367 = vand.u32 2147483647, %v351
        %v368 = vand.u32 2147483647, %v352
        %v369 = vand.u32 2147483647, %v353
        %v370 = vand.u32 2147483647, %v354
        %v371 = vand.u32 2147483647, %v355
        %v372 = vand.u32 2147483647, %v356
        %v373 = vand.u32 2147483647, %v357
        %v374 = vand.u32 2147483647, %v358
        %v375 = vand.u32 2147483647, %v359
        %v376 = vand.u32 2147483647, %v360
        %v377 = vand.u32 2147483647, %v361
        %v378 = vand.u32 2147483647, %v362
        %v379 = vand.u32 2147483647, %v363
        %380 = vset.pattern.permute.xlu0 1
        %381 = vperm.xlu0 %380, %v247
        %v382 = vpop.permute.xlu0 %381
        %384 = vset.pattern.permute.xlu0 1
        %385 = vperm.xlu0 %384, %v248
        %v386 = vpop.permute.xlu0 %385
        %388 = vset.pattern.permute.xlu0 1
        %389 = vperm.xlu0 %388, %v249
        %v390 = vpop.permute.xlu0 %389
        %392 = vset.pattern.permute.xlu0 1
        %393 = vperm.xlu0 %392, %v250
        %v394 = vpop.permute.xlu0 %393
        %396 = vset.pattern.permute.xlu0 1
        %397 = vperm.xlu0 %396, %v251
        %v398 = vpop.permute.xlu0 %397
        %400 = vset.pattern.permute.xlu0 1
        %401 = vperm.xlu0 %400, %v252
        %v402 = vpop.permute.xlu0 %401
        %404 = vset.pattern.permute.xlu0 1
        %405 = vperm.xlu0 %404, %v253
        %v406 = vpop.permute.xlu0 %405
        %408 = vset.pattern.permute.xlu0 1
        %409 = vperm.xlu0 %408, %v254
        %v410 = vpop.permute.xlu0 %409
        %412 = vset.pattern.permute.xlu0 1
        %413 = vperm.xlu0 %412, %v255
        %v414 = vpop.permute.xlu0 %413
        %416 = vset.pattern.permute.xlu0 1
        %417 = vperm.xlu0 %416, %v256
        %v418 = vpop.permute.xlu0 %417
        %420 = vset.pattern.permute.xlu0 1
        %421 = vperm.xlu0 %420, %v257
        %v422 = vpop.permute.xlu0 %421
        %424 = vset.pattern.permute.xlu0 1
        %425 = vperm.xlu0 %424, %v258
        %v426 = vpop.permute.xlu0 %425
        %428 = vset.pattern.permute.xlu0 1
        %429 = vperm.xlu0 %428, %v259
        %v430 = vpop.permute.xlu0 %429
        %432 = vset.pattern.permute.xlu0 1
        %433 = vperm.xlu0 %432, %v260
        %v434 = vpop.permute.xlu0 %433
        %436 = vset.pattern.permute.xlu0 1
        %437 = vperm.xlu0 %436, %v261
        %v438 = vpop.permute.xlu0 %437
        %440 = vset.pattern.permute.xlu0 1
        %441 = vperm.xlu0 %440, %v262
        %v442 = vpop.permute.xlu0 %441
        %v444 = vlaneseq
        %v445 = vshrl.u32 %v444, 7
        %v446 = vsub.s32 1, %v445
        %v447 = vrot.slane %v263, %v446
        %v448 = vsub.f32 %v382, %v447
        %v449 = vsub.f32 %v386, %v447
        %v450 = vsub.f32 %v390, %v447
        %v451 = vsub.f32 %v394, %v447
        %v452 = vsub.f32 %v398, %v447
        %v453 = vsub.f32 %v402, %v447
        %v454 = vsub.f32 %v406, %v447
        %v455 = vsub.f32 %v410, %v447
        %v456 = vsub.f32 %v414, %v447
        %v457 = vsub.f32 %v418, %v447
        %v458 = vsub.f32 %v422, %v447
        %v459 = vsub.f32 %v426, %v447
        %v460 = vsub.f32 %v430, %v447
        %v461 = vsub.f32 %v434, %v447
        %v462 = vsub.f32 %v438, %v447
        %v463 = vsub.f32 %v442, %v447
        %v464 = vand.u32 2147483647, %v448
        %v465 = vand.u32 2147483647, %v449
        %v466 = vand.u32 2147483647, %v450
        %v467 = vand.u32 2147483647, %v451
        %v468 = vand.u32 2147483647, %v452
        %v469 = vand.u32 2147483647, %v453
        %v470 = vand.u32 2147483647, %v454
        %v471 = vand.u32 2147483647, %v455
        %v472 = vand.u32 2147483647, %v456
        %v473 = vand.u32 2147483647, %v457
        %v474 = vand.u32 2147483647, %v458
        %v475 = vand.u32 2147483647, %v459
        %v476 = vand.u32 2147483647, %v460
        %v477 = vand.u32 2147483647, %v461
        %v478 = vand.u32 2147483647, %v462
        %v479 = vand.u32 2147483647, %v463
        %v480 = vadd.f32 %v364, %v464
        %v481 = vadd.f32 %v365, %v465
        %v482 = vadd.f32 %v366, %v466
        %v483 = vadd.f32 %v367, %v467
        %v484 = vadd.f32 %v368, %v468
        %v485 = vadd.f32 %v369, %v469
        %v486 = vadd.f32 %v370, %v470
        %v487 = vadd.f32 %v371, %v471
        %v488 = vadd.f32 %v372, %v472
        %v489 = vadd.f32 %v373, %v473
        %v490 = vadd.f32 %v374, %v474
        %v491 = vadd.f32 %v375, %v475
        %v492 = vadd.f32 %v376, %v476
        %v493 = vadd.f32 %v377, %v477
        %v494 = vadd.f32 %v378, %v478
        %v495 = vadd.f32 %v379, %v479
        %496 = vset.pattern.permute.xlu0 2
        %497 = vperm.xlu0 %496, %v247
        %v498 = vpop.permute.xlu0 %497
        %500 = vset.pattern.permute.xlu0 2
        %501 = vperm.xlu0 %500, %v248
        %v502 = vpop.permute.xlu0 %501
        %504 = vset.pattern.permute.xlu0 2
        %505 = vperm.xlu0 %504, %v249
        %v506 = vpop.permute.xlu0 %505
        %508 = vset.pattern.permute.xlu0 2
        %509 = vperm.xlu0 %508, %v250
        %v510 = vpop.permute.xlu0 %509
        %512 = vset.pattern.permute.xlu0 2
        %513 = vperm.xlu0 %512, %v251
        %v514 = vpop.permute.xlu0 %513
        %516 = vset.pattern.permute.xlu0 2
        %517 = vperm.xlu0 %516, %v252
        %v518 = vpop.permute.xlu0 %517
        %520 = vset.pattern.permute.xlu0 2
        %521 = vperm.xlu0 %520, %v253
        %v522 = vpop.permute.xlu0 %521
        %524 = vset.pattern.permute.xlu0 2
        %525 = vperm.xlu0 %524, %v254
        %v526 = vpop.permute.xlu0 %525
        %528 = vset.pattern.permute.xlu0 2
        %529 = vperm.xlu0 %528, %v255
        %v530 = vpop.permute.xlu0 %529
        %532 = vset.pattern.permute.xlu0 2
        %533 = vperm.xlu0 %532, %v256
        %v534 = vpop.permute.xlu0 %533
        %536 = vset.pattern.permute.xlu0 2
        %537 = vperm.xlu0 %536, %v257
        %v538 = vpop.permute.xlu0 %537
        %540 = vset.pattern.permute.xlu0 2
        %541 = vperm.xlu0 %540, %v258
        %v542 = vpop.permute.xlu0 %541
        %544 = vset.pattern.permute.xlu0 2
        %545 = vperm.xlu0 %544, %v259
        %v546 = vpop.permute.xlu0 %545
        %548 = vset.pattern.permute.xlu0 2
        %549 = vperm.xlu0 %548, %v260
        %v550 = vpop.permute.xlu0 %549
        %552 = vset.pattern.permute.xlu0 2
        %553 = vperm.xlu0 %552, %v261
        %v554 = vpop.permute.xlu0 %553
        %556 = vset.pattern.permute.xlu0 2
        %557 = vperm.xlu0 %556, %v262
        %v558 = vpop.permute.xlu0 %557
        %v560 = vlaneseq
        %v561 = vshrl.u32 %v560, 7
        %v562 = vsub.s32 2, %v561
        %v563 = vrot.slane %v263, %v562
        %v564 = vsub.f32 %v498, %v563
        %v565 = vsub.f32 %v502, %v563
        %v566 = vsub.f32 %v506, %v563
        %v567 = vsub.f32 %v510, %v563
        %v568 = vsub.f32 %v514, %v563
        %v569 = vsub.f32 %v518, %v563
        %v570 = vsub.f32 %v522, %v563
        %v571 = vsub.f32 %v526, %v563
        %v572 = vsub.f32 %v530, %v563
        %v573 = vsub.f32 %v534, %v563
        %v574 = vsub.f32 %v538, %v563
        %v575 = vsub.f32 %v542, %v563
        %v576 = vsub.f32 %v546, %v563
        %v577 = vsub.f32 %v550, %v563
        %v578 = vsub.f32 %v554, %v563
        %v579 = vsub.f32 %v558, %v563
        %v580 = vand.u32 2147483647, %v564
        %v581 = vand.u32 2147483647, %v565
        %v582 = vand.u32 2147483647, %v566
        %v583 = vand.u32 2147483647, %v567
        %v584 = vand.u32 2147483647, %v568
        %v585 = vand.u32 2147483647, %v569
        %v586 = vand.u32 2147483647, %v570
        %v587 = vand.u32 2147483647, %v571
        %v588 = vand.u32 2147483647, %v572
        %v589 = vand.u32 2147483647, %v573
        %v590 = vand.u32 2147483647, %v574
        %v591 = vand.u32 2147483647, %v575
        %v592 = vand.u32 2147483647, %v576
        %v593 = vand.u32 2147483647, %v577
        %v594 = vand.u32 2147483647, %v578
        %v595 = vand.u32 2147483647, %v579
        %v596 = vadd.f32 %v480, %v580
        %v597 = vadd.f32 %v481, %v581
        %v598 = vadd.f32 %v482, %v582
        %v599 = vadd.f32 %v483, %v583
        %v600 = vadd.f32 %v484, %v584
        %v601 = vadd.f32 %v485, %v585
        %v602 = vadd.f32 %v486, %v586
        %v603 = vadd.f32 %v487, %v587
        %v604 = vadd.f32 %v488, %v588
        %v605 = vadd.f32 %v489, %v589
        %v606 = vadd.f32 %v490, %v590
        %v607 = vadd.f32 %v491, %v591
        %v608 = vadd.f32 %v492, %v592
        %v609 = vadd.f32 %v493, %v593
        %v610 = vadd.f32 %v494, %v594
        %v611 = vadd.f32 %v495, %v595
        %612 = vset.pattern.permute.xlu0 3
        %613 = vperm.xlu0 %612, %v247
        %v614 = vpop.permute.xlu0 %613
        %616 = vset.pattern.permute.xlu0 3
        %617 = vperm.xlu0 %616, %v248
        %v618 = vpop.permute.xlu0 %617
        %620 = vset.pattern.permute.xlu0 3
        %621 = vperm.xlu0 %620, %v249
        %v622 = vpop.permute.xlu0 %621
        %624 = vset.pattern.permute.xlu0 3
        %625 = vperm.xlu0 %624, %v250
        %v626 = vpop.permute.xlu0 %625
        %628 = vset.pattern.permute.xlu0 3
        %629 = vperm.xlu0 %628, %v251
        %v630 = vpop.permute.xlu0 %629
        %632 = vset.pattern.permute.xlu0 3
        %633 = vperm.xlu0 %632, %v252
        %v634 = vpop.permute.xlu0 %633
        %636 = vset.pattern.permute.xlu0 3
        %637 = vperm.xlu0 %636, %v253
        %v638 = vpop.permute.xlu0 %637
        %640 = vset.pattern.permute.xlu0 3
        %641 = vperm.xlu0 %640, %v254
        %v642 = vpop.permute.xlu0 %641
        %644 = vset.pattern.permute.xlu0 3
        %645 = vperm.xlu0 %644, %v255
        %v646 = vpop.permute.xlu0 %645
        %648 = vset.pattern.permute.xlu0 3
        %649 = vperm.xlu0 %648, %v256
        %v650 = vpop.permute.xlu0 %649
        %652 = vset.pattern.permute.xlu0 3
        %653 = vperm.xlu0 %652, %v257
        %v654 = vpop.permute.xlu0 %653
        %656 = vset.pattern.permute.xlu0 3
        %657 = vperm.xlu0 %656, %v258
        %v658 = vpop.permute.xlu0 %657
        %660 = vset.pattern.permute.xlu0 3
        %661 = vperm.xlu0 %660, %v259
        %v662 = vpop.permute.xlu0 %661
        %664 = vset.pattern.permute.xlu0 3
        %665 = vperm.xlu0 %664, %v260
        %v666 = vpop.permute.xlu0 %665
        %668 = vset.pattern.permute.xlu0 3
        %669 = vperm.xlu0 %668, %v261
        %v670 = vpop.permute.xlu0 %669
        %672 = vset.pattern.permute.xlu0 3
        %673 = vperm.xlu0 %672, %v262
        %v674 = vpop.permute.xlu0 %673
        %v676 = vlaneseq
        %v677 = vshrl.u32 %v676, 7
        %v678 = vsub.s32 3, %v677
        %v679 = vrot.slane %v263, %v678
        %v680 = vsub.f32 %v614, %v679
        %v681 = vsub.f32 %v618, %v679
        %v682 = vsub.f32 %v622, %v679
        %v683 = vsub.f32 %v626, %v679
        %v684 = vsub.f32 %v630, %v679
        %v685 = vsub.f32 %v634, %v679
        %v686 = vsub.f32 %v638, %v679
        %v687 = vsub.f32 %v642, %v679
        %v688 = vsub.f32 %v646, %v679
        %v689 = vsub.f32 %v650, %v679
        %v690 = vsub.f32 %v654, %v679
        %v691 = vsub.f32 %v658, %v679
        %v692 = vsub.f32 %v662, %v679
        %v693 = vsub.f32 %v666, %v679
        %v694 = vsub.f32 %v670, %v679
        %v695 = vsub.f32 %v674, %v679
        %v696 = vand.u32 2147483647, %v680
        %v697 = vand.u32 2147483647, %v681
        %v698 = vand.u32 2147483647, %v682
        %v699 = vand.u32 2147483647, %v683
        %v700 = vand.u32 2147483647, %v684
        %v701 = vand.u32 2147483647, %v685
        %v702 = vand.u32 2147483647, %v686
        %v703 = vand.u32 2147483647, %v687
        %v704 = vand.u32 2147483647, %v688
        %v705 = vand.u32 2147483647, %v689
        %v706 = vand.u32 2147483647, %v690
        %v707 = vand.u32 2147483647, %v691
        %v708 = vand.u32 2147483647, %v692
        %v709 = vand.u32 2147483647, %v693
        %v710 = vand.u32 2147483647, %v694
        %v711 = vand.u32 2147483647, %v695
        %v712 = vadd.f32 %v596, %v696
        %v713 = vadd.f32 %v597, %v697
        %v714 = vadd.f32 %v598, %v698
        %v715 = vadd.f32 %v599, %v699
        %v716 = vadd.f32 %v600, %v700
        %v717 = vadd.f32 %v601, %v701
        %v718 = vadd.f32 %v602, %v702
        %v719 = vadd.f32 %v603, %v703
        %v720 = vadd.f32 %v604, %v704
        %v721 = vadd.f32 %v605, %v705
        %v722 = vadd.f32 %v606, %v706
        %v723 = vadd.f32 %v607, %v707
        %v724 = vadd.f32 %v608, %v708
        %v725 = vadd.f32 %v609, %v709
        %v726 = vadd.f32 %v610, %v710
        %v727 = vadd.f32 %v611, %v711
        %v728 = vmul.f32 %v247, 0.5
        %v729 = vmul.f32 %v248, 0.5
        %v730 = vmul.f32 %v249, 0.5
        %v731 = vmul.f32 %v250, 0.5
        %v732 = vmul.f32 %v251, 0.5
        %v733 = vmul.f32 %v252, 0.5
        %v734 = vmul.f32 %v253, 0.5
        %v735 = vmul.f32 %v254, 0.5
        %v736 = vmul.f32 %v255, 0.5
        %v737 = vmul.f32 %v256, 0.5
        %v738 = vmul.f32 %v257, 0.5
        %v739 = vmul.f32 %v258, 0.5
        %v740 = vmul.f32 %v259, 0.5
        %v741 = vmul.f32 %v260, 0.5
        %v742 = vmul.f32 %v261, 0.5
        %v743 = vmul.f32 %v262, 0.5
        %760 = vrot.lane.b32.xlu0 %v728, 126
        %v761 = vpop.permute.xlu0 %760
        %762 = vrot.lane.b32.xlu0 %v729, 126
        %v763 = vpop.permute.xlu0 %762
        %764 = vrot.lane.b32.xlu0 %v730, 126
        %v765 = vpop.permute.xlu0 %764
        %766 = vrot.lane.b32.xlu0 %v731, 126
        %v767 = vpop.permute.xlu0 %766
        %768 = vrot.lane.b32.xlu0 %v732, 126
        %v769 = vpop.permute.xlu0 %768
        %770 = vrot.lane.b32.xlu0 %v733, 126
        %v771 = vpop.permute.xlu0 %770
        %772 = vrot.lane.b32.xlu0 %v734, 126
        %v773 = vpop.permute.xlu0 %772
        %774 = vrot.lane.b32.xlu0 %v735, 126
        %v775 = vpop.permute.xlu0 %774
        %776 = vrot.lane.b32.xlu0 %v736, 126
        %v777 = vpop.permute.xlu0 %776
        %778 = vrot.lane.b32.xlu0 %v737, 126
        %v779 = vpop.permute.xlu0 %778
        %780 = vrot.lane.b32.xlu0 %v738, 126
        %v781 = vpop.permute.xlu0 %780
        %782 = vrot.lane.b32.xlu0 %v739, 126
        %v783 = vpop.permute.xlu0 %782
        %784 = vrot.lane.b32.xlu0 %v740, 126
        %v785 = vpop.permute.xlu0 %784
        %786 = vrot.lane.b32.xlu0 %v741, 126
        %v787 = vpop.permute.xlu0 %786
        %788 = vrot.lane.b32.xlu0 %v742, 126
        %v789 = vpop.permute.xlu0 %788
        %790 = vrot.lane.b32.xlu0 %v743, 126
        %v791 = vpop.permute.xlu0 %790
        %v808 = vsub.f32 %v247, %v761
        %v809 = vsub.f32 %v248, %v763
        %v810 = vsub.f32 %v249, %v765
        %v811 = vsub.f32 %v250, %v767
        %v812 = vsub.f32 %v251, %v769
        %v813 = vsub.f32 %v252, %v771
        %v814 = vsub.f32 %v253, %v773
        %v815 = vsub.f32 %v254, %v775
        %v816 = vsub.f32 %v255, %v777
        %v817 = vsub.f32 %v256, %v779
        %v818 = vsub.f32 %v257, %v781
        %v819 = vsub.f32 %v258, %v783
        %v820 = vsub.f32 %v259, %v785
        %v821 = vsub.f32 %v260, %v787
        %v822 = vsub.f32 %v261, %v789
        %v823 = vsub.f32 %v262, %v791
        %v824 = vadd.f32 %v247, %v761
        %v825 = vadd.f32 %v248, %v763
        %v826 = vadd.f32 %v249, %v765
        %v827 = vadd.f32 %v250, %v767
        %v828 = vadd.f32 %v251, %v769
        %v829 = vadd.f32 %v252, %v771
        %v830 = vadd.f32 %v253, %v773
        %v831 = vadd.f32 %v254, %v775
        %v832 = vadd.f32 %v255, %v777
        %v833 = vadd.f32 %v256, %v779
        %v834 = vadd.f32 %v257, %v781
        %v835 = vadd.f32 %v258, %v783
        %v836 = vadd.f32 %v259, %v785
        %v837 = vadd.f32 %v260, %v787
        %v838 = vadd.f32 %v261, %v789
        %v839 = vadd.f32 %v262, %v791
        %v840 = vmul.f32 %v263, 0.5
        %v842 = vrot.slane %v840, 2
        %v844 = vsub.f32 %v263, %v842
        %v845 = vadd.f32 %v263, %v842
        %v846 = vsub.f32 %v824, %v808
        %v847 = vsub.f32 %v825, %v809
        %v848 = vsub.f32 %v826, %v810
        %v849 = vsub.f32 %v827, %v811
        %v850 = vsub.f32 %v828, %v812
        %v851 = vsub.f32 %v829, %v813
        %v852 = vsub.f32 %v830, %v814
        %v853 = vsub.f32 %v831, %v815
        %v854 = vsub.f32 %v832, %v816
        %v855 = vsub.f32 %v833, %v817
        %v856 = vsub.f32 %v834, %v818
        %v857 = vsub.f32 %v835, %v819
        %v858 = vsub.f32 %v836, %v820
        %v859 = vsub.f32 %v837, %v821
        %v860 = vsub.f32 %v838, %v822
        %v861 = vsub.f32 %v839, %v823
        %878 = vrot.lane.b32.xlu0 %v846, 127
        %v879 = vpop.permute.xlu0 %878
        %880 = vrot.lane.b32.xlu0 %v847, 127
        %v881 = vpop.permute.xlu0 %880
        %882 = vrot.lane.b32.xlu0 %v848, 127
        %v883 = vpop.permute.xlu0 %882
        %884 = vrot.lane.b32.xlu0 %v849, 127
        %v885 = vpop.permute.xlu0 %884
        %886 = vrot.lane.b32.xlu0 %v850, 127
        %v887 = vpop.permute.xlu0 %886
        %888 = vrot.lane.b32.xlu0 %v851, 127
        %v889 = vpop.permute.xlu0 %888
        %890 = vrot.lane.b32.xlu0 %v852, 127
        %v891 = vpop.permute.xlu0 %890
        %892 = vrot.lane.b32.xlu0 %v853, 127
        %v893 = vpop.permute.xlu0 %892
        %894 = vrot.lane.b32.xlu0 %v854, 127
        %v895 = vpop.permute.xlu0 %894
        %896 = vrot.lane.b32.xlu0 %v855, 127
        %v897 = vpop.permute.xlu0 %896
        %898 = vrot.lane.b32.xlu0 %v856, 127
        %v899 = vpop.permute.xlu0 %898
        %900 = vrot.lane.b32.xlu0 %v857, 127
        %v901 = vpop.permute.xlu0 %900
        %902 = vrot.lane.b32.xlu0 %v858, 127
        %v903 = vpop.permute.xlu0 %902
        %904 = vrot.lane.b32.xlu0 %v859, 127
        %v905 = vpop.permute.xlu0 %904
        %906 = vrot.lane.b32.xlu0 %v860, 127
        %v907 = vpop.permute.xlu0 %906
        %908 = vrot.lane.b32.xlu0 %v861, 127
        %v909 = vpop.permute.xlu0 %908
        %v926 = vmul.f32 %v846, %v879
        %v927 = vmul.f32 %v847, %v881
        %v928 = vmul.f32 %v848, %v883
        %v929 = vmul.f32 %v849, %v885
        %v930 = vmul.f32 %v850, %v887
        %v931 = vmul.f32 %v851, %v889
        %v932 = vmul.f32 %v852, %v891
        %v933 = vmul.f32 %v853, %v893
        %v934 = vmul.f32 %v854, %v895
        %v935 = vmul.f32 %v855, %v897
        %v936 = vmul.f32 %v856, %v899
        %v937 = vmul.f32 %v857, %v901
        %v938 = vmul.f32 %v858, %v903
        %v939 = vmul.f32 %v859, %v905
        %v940 = vmul.f32 %v860, %v907
        %v941 = vmul.f32 %v861, %v909
        %v942 = vsub.f32 %v845, %v844
        %v944 = vrot.slane %v942, 1
        %v946 = vmul.f32 %v942, %v944
        %948 = vset.pattern.permute.xlu0 0
        %949 = vperm.xlu0 %948, %v824
        %v950 = vpop.permute.xlu0 %949
        %953 = vset.pattern.permute.xlu0 0
        %954 = vperm.xlu0 %953, %v825
        %v955 = vpop.permute.xlu0 %954
        %958 = vset.pattern.permute.xlu0 0
        %959 = vperm.xlu0 %958, %v826
        %v960 = vpop.permute.xlu0 %959
        %963 = vset.pattern.permute.xlu0 0
        %964 = vperm.xlu0 %963, %v827
        %v965 = vpop.permute.xlu0 %964
        %968 = vset.pattern.permute.xlu0 0
        %969 = vperm.xlu0 %968, %v828
        %v970 = vpop.permute.xlu0 %969
        %973 = vset.pattern.permute.xlu0 0
        %974 = vperm.xlu0 %973, %v829
        %v975 = vpop.permute.xlu0 %974
        %978 = vset.pattern.permute.xlu0 0
        %979 = vperm.xlu0 %978, %v830
        %v980 = vpop.permute.xlu0 %979
        %983 = vset.pattern.permute.xlu0 0
        %984 = vperm.xlu0 %983, %v831
        %v985 = vpop.permute.xlu0 %984
        %988 = vset.pattern.permute.xlu0 0
        %989 = vperm.xlu0 %988, %v832
        %v990 = vpop.permute.xlu0 %989
        %993 = vset.pattern.permute.xlu0 0
        %994 = vperm.xlu0 %993, %v833
        %v995 = vpop.permute.xlu0 %994
        %998 = vset.pattern.permute.xlu0 0
        %999 = vperm.xlu0 %998, %v834
        %v1000 = vpop.permute.xlu0 %999
        %1003 = vset.pattern.permute.xlu0 0
        %1004 = vperm.xlu0 %1003, %v835
        %v1005 = vpop.permute.xlu0 %1004
        %1008 = vset.pattern.permute.xlu0 0
        %1009 = vperm.xlu0 %1008, %v836
        %v1010 = vpop.permute.xlu0 %1009
        %1013 = vset.pattern.permute.xlu0 0
        %1014 = vperm.xlu0 %1013, %v837
        %v1015 = vpop.permute.xlu0 %1014
        %1018 = vset.pattern.permute.xlu0 0
        %1019 = vperm.xlu0 %1018, %v838
        %v1020 = vpop.permute.xlu0 %1019
        %1023 = vset.pattern.permute.xlu0 0
        %1024 = vperm.xlu0 %1023, %v839
        %v1025 = vpop.permute.xlu0 %1024
        %v1027 = vlaneseq
        %v1028 = vshrl.u32 %v1027, 7
        %v1029 = vsub.s32 0, %v1028
        %v1030 = vrot.slane %v845, %v1029
        %v1031 = vmin.f32 %v950, %v1030
        %v1032 = vmin.f32 %v955, %v1030
        %v1033 = vmin.f32 %v960, %v1030
        %v1034 = vmin.f32 %v965, %v1030
        %v1035 = vmin.f32 %v970, %v1030
        %v1036 = vmin.f32 %v975, %v1030
        %v1037 = vmin.f32 %v980, %v1030
        %v1038 = vmin.f32 %v985, %v1030
        %v1039 = vmin.f32 %v990, %v1030
        %v1040 = vmin.f32 %v995, %v1030
        %v1041 = vmin.f32 %v1000, %v1030
        %v1042 = vmin.f32 %v1005, %v1030
        %v1043 = vmin.f32 %v1010, %v1030
        %v1044 = vmin.f32 %v1015, %v1030
        %v1045 = vmin.f32 %v1020, %v1030
        %v1046 = vmin.f32 %v1025, %v1030
        %1048 = vset.pattern.permute.xlu0 0
        %1049 = vperm.xlu0 %1048, %v808
        %v1050 = vpop.permute.xlu0 %1049
        %1053 = vset.pattern.permute.xlu0 0
        %1054 = vperm.xlu0 %1053, %v809
        %v1055 = vpop.permute.xlu0 %1054
        %1058 = vset.pattern.permute.xlu0 0
        %1059 = vperm.xlu0 %1058, %v810
        %v1060 = vpop.permute.xlu0 %1059
        %1063 = vset.pattern.permute.xlu0 0
        %1064 = vperm.xlu0 %1063, %v811
        %v1065 = vpop.permute.xlu0 %1064
        %1068 = vset.pattern.permute.xlu0 0
        %1069 = vperm.xlu0 %1068, %v812
        %v1070 = vpop.permute.xlu0 %1069
        %1073 = vset.pattern.permute.xlu0 0
        %1074 = vperm.xlu0 %1073, %v813
        %v1075 = vpop.permute.xlu0 %1074
        %1078 = vset.pattern.permute.xlu0 0
        %1079 = vperm.xlu0 %1078, %v814
        %v1080 = vpop.permute.xlu0 %1079
        %1083 = vset.pattern.permute.xlu0 0
        %1084 = vperm.xlu0 %1083, %v815
        %v1085 = vpop.permute.xlu0 %1084
        %1088 = vset.pattern.permute.xlu0 0
        %1089 = vperm.xlu0 %1088, %v816
        %v1090 = vpop.permute.xlu0 %1089
        %1093 = vset.pattern.permute.xlu0 0
        %1094 = vperm.xlu0 %1093, %v817
        %v1095 = vpop.permute.xlu0 %1094
        %1098 = vset.pattern.permute.xlu0 0
        %1099 = vperm.xlu0 %1098, %v818
        %v1100 = vpop.permute.xlu0 %1099
        %1103 = vset.pattern.permute.xlu0 0
        %1104 = vperm.xlu0 %1103, %v819
        %v1105 = vpop.permute.xlu0 %1104
        %1108 = vset.pattern.permute.xlu0 0
        %1109 = vperm.xlu0 %1108, %v820
        %v1110 = vpop.permute.xlu0 %1109
        %1113 = vset.pattern.permute.xlu0 0
        %1114 = vperm.xlu0 %1113, %v821
        %v1115 = vpop.permute.xlu0 %1114
        %1118 = vset.pattern.permute.xlu0 0
        %1119 = vperm.xlu0 %1118, %v822
        %v1120 = vpop.permute.xlu0 %1119
        %1123 = vset.pattern.permute.xlu0 0
        %1124 = vperm.xlu0 %1123, %v823
        %v1125 = vpop.permute.xlu0 %1124
        %v1127 = vlaneseq
        %v1128 = vshrl.u32 %v1127, 7
        %v1129 = vsub.s32 0, %v1128
        %v1130 = vrot.slane %v844, %v1129
        %v1131 = vmax.f32 %v1050, %v1130
        %v1132 = vmax.f32 %v1055, %v1130
        %v1133 = vmax.f32 %v1060, %v1130
        %v1134 = vmax.f32 %v1065, %v1130
        %v1135 = vmax.f32 %v1070, %v1130
        %v1136 = vmax.f32 %v1075, %v1130
        %v1137 = vmax.f32 %v1080, %v1130
        %v1138 = vmax.f32 %v1085, %v1130
        %v1139 = vmax.f32 %v1090, %v1130
        %v1140 = vmax.f32 %v1095, %v1130
        %v1141 = vmax.f32 %v1100, %v1130
        %v1142 = vmax.f32 %v1105, %v1130
        %v1143 = vmax.f32 %v1110, %v1130
        %v1144 = vmax.f32 %v1115, %v1130
        %v1145 = vmax.f32 %v1120, %v1130
        %v1146 = vmax.f32 %v1125, %v1130
        %v1147 = vsub.f32 %v1031, %v1131
        %v1148 = vsub.f32 %v1032, %v1132
        %v1149 = vsub.f32 %v1033, %v1133
        %v1150 = vsub.f32 %v1034, %v1134
        %v1151 = vsub.f32 %v1035, %v1135
        %v1152 = vsub.f32 %v1036, %v1136
        %v1153 = vsub.f32 %v1037, %v1137
        %v1154 = vsub.f32 %v1038, %v1138
        %v1155 = vsub.f32 %v1039, %v1139
        %v1156 = vsub.f32 %v1040, %v1140
        %v1157 = vsub.f32 %v1041, %v1141
        %v1158 = vsub.f32 %v1042, %v1142
        %v1159 = vsub.f32 %v1043, %v1143
        %v1160 = vsub.f32 %v1044, %v1144
        %v1161 = vsub.f32 %v1045, %v1145
        %v1162 = vsub.f32 %v1046, %v1146
        %v1163 = vmax.f32 %v1147, 0.0
        %v1164 = vmax.f32 %v1148, 0.0
        %v1165 = vmax.f32 %v1149, 0.0
        %v1166 = vmax.f32 %v1150, 0.0
        %v1167 = vmax.f32 %v1151, 0.0
        %v1168 = vmax.f32 %v1152, 0.0
        %v1169 = vmax.f32 %v1153, 0.0
        %v1170 = vmax.f32 %v1154, 0.0
        %v1171 = vmax.f32 %v1155, 0.0
        %v1172 = vmax.f32 %v1156, 0.0
        %v1173 = vmax.f32 %v1157, 0.0
        %v1174 = vmax.f32 %v1158, 0.0
        %v1175 = vmax.f32 %v1159, 0.0
        %v1176 = vmax.f32 %v1160, 0.0
        %v1177 = vmax.f32 %v1161, 0.0
        %v1178 = vmax.f32 %v1162, 0.0
        %1179 = vset.pattern.permute.xlu0 1
        %1180 = vperm.xlu0 %1179, %v824
        %v1181 = vpop.permute.xlu0 %1180
        %1183 = vset.pattern.permute.xlu0 1
        %1184 = vperm.xlu0 %1183, %v825
        %v1185 = vpop.permute.xlu0 %1184
        %1187 = vset.pattern.permute.xlu0 1
        %1188 = vperm.xlu0 %1187, %v826
        %v1189 = vpop.permute.xlu0 %1188
        %1191 = vset.pattern.permute.xlu0 1
        %1192 = vperm.xlu0 %1191, %v827
        %v1193 = vpop.permute.xlu0 %1192
        %1195 = vset.pattern.permute.xlu0 1
        %1196 = vperm.xlu0 %1195, %v828
        %v1197 = vpop.permute.xlu0 %1196
        %1199 = vset.pattern.permute.xlu0 1
        %1200 = vperm.xlu0 %1199, %v829
        %v1201 = vpop.permute.xlu0 %1200
        %1203 = vset.pattern.permute.xlu0 1
        %1204 = vperm.xlu0 %1203, %v830
        %v1205 = vpop.permute.xlu0 %1204
        %1207 = vset.pattern.permute.xlu0 1
        %1208 = vperm.xlu0 %1207, %v831
        %v1209 = vpop.permute.xlu0 %1208
        %1211 = vset.pattern.permute.xlu0 1
        %1212 = vperm.xlu0 %1211, %v832
        %v1213 = vpop.permute.xlu0 %1212
        %1215 = vset.pattern.permute.xlu0 1
        %1216 = vperm.xlu0 %1215, %v833
        %v1217 = vpop.permute.xlu0 %1216
        %1219 = vset.pattern.permute.xlu0 1
        %1220 = vperm.xlu0 %1219, %v834
        %v1221 = vpop.permute.xlu0 %1220
        %1223 = vset.pattern.permute.xlu0 1
        %1224 = vperm.xlu0 %1223, %v835
        %v1225 = vpop.permute.xlu0 %1224
        %1227 = vset.pattern.permute.xlu0 1
        %1228 = vperm.xlu0 %1227, %v836
        %v1229 = vpop.permute.xlu0 %1228
        %1231 = vset.pattern.permute.xlu0 1
        %1232 = vperm.xlu0 %1231, %v837
        %v1233 = vpop.permute.xlu0 %1232
        %1235 = vset.pattern.permute.xlu0 1
        %1236 = vperm.xlu0 %1235, %v838
        %v1237 = vpop.permute.xlu0 %1236
        %1239 = vset.pattern.permute.xlu0 1
        %1240 = vperm.xlu0 %1239, %v839
        %v1241 = vpop.permute.xlu0 %1240
        %v1243 = vlaneseq
        %v1244 = vshrl.u32 %v1243, 7
        %v1245 = vsub.s32 1, %v1244
        %v1246 = vrot.slane %v845, %v1245
        %v1247 = vmin.f32 %v1181, %v1246
        %v1248 = vmin.f32 %v1185, %v1246
        %v1249 = vmin.f32 %v1189, %v1246
        %v1250 = vmin.f32 %v1193, %v1246
        %v1251 = vmin.f32 %v1197, %v1246
        %v1252 = vmin.f32 %v1201, %v1246
        %v1253 = vmin.f32 %v1205, %v1246
        %v1254 = vmin.f32 %v1209, %v1246
        %v1255 = vmin.f32 %v1213, %v1246
        %v1256 = vmin.f32 %v1217, %v1246
        %v1257 = vmin.f32 %v1221, %v1246
        %v1258 = vmin.f32 %v1225, %v1246
        %v1259 = vmin.f32 %v1229, %v1246
        %v1260 = vmin.f32 %v1233, %v1246
        %v1261 = vmin.f32 %v1237, %v1246
        %v1262 = vmin.f32 %v1241, %v1246
        %1263 = vset.pattern.permute.xlu0 1
        %1264 = vperm.xlu0 %1263, %v808
        %v1265 = vpop.permute.xlu0 %1264
        %1267 = vset.pattern.permute.xlu0 1
        %1268 = vperm.xlu0 %1267, %v809
        %v1269 = vpop.permute.xlu0 %1268
        %1271 = vset.pattern.permute.xlu0 1
        %1272 = vperm.xlu0 %1271, %v810
        %v1273 = vpop.permute.xlu0 %1272
        %1275 = vset.pattern.permute.xlu0 1
        %1276 = vperm.xlu0 %1275, %v811
        %v1277 = vpop.permute.xlu0 %1276
        %1279 = vset.pattern.permute.xlu0 1
        %1280 = vperm.xlu0 %1279, %v812
        %v1281 = vpop.permute.xlu0 %1280
        %1283 = vset.pattern.permute.xlu0 1
        %1284 = vperm.xlu0 %1283, %v813
        %v1285 = vpop.permute.xlu0 %1284
        %1287 = vset.pattern.permute.xlu0 1
        %1288 = vperm.xlu0 %1287, %v814
        %v1289 = vpop.permute.xlu0 %1288
        %1291 = vset.pattern.permute.xlu0 1
        %1292 = vperm.xlu0 %1291, %v815
        %v1293 = vpop.permute.xlu0 %1292
        %1295 = vset.pattern.permute.xlu0 1
        %1296 = vperm.xlu0 %1295, %v816
        %v1297 = vpop.permute.xlu0 %1296
        %1299 = vset.pattern.permute.xlu0 1
        %1300 = vperm.xlu0 %1299, %v817
        %v1301 = vpop.permute.xlu0 %1300
        %1303 = vset.pattern.permute.xlu0 1
        %1304 = vperm.xlu0 %1303, %v818
        %v1305 = vpop.permute.xlu0 %1304
        %1307 = vset.pattern.permute.xlu0 1
        %1308 = vperm.xlu0 %1307, %v819
        %v1309 = vpop.permute.xlu0 %1308
        %1311 = vset.pattern.permute.xlu0 1
        %1312 = vperm.xlu0 %1311, %v820
        %v1313 = vpop.permute.xlu0 %1312
        %1315 = vset.pattern.permute.xlu0 1
        %1316 = vperm.xlu0 %1315, %v821
        %v1317 = vpop.permute.xlu0 %1316
        %1319 = vset.pattern.permute.xlu0 1
        %1320 = vperm.xlu0 %1319, %v822
        %v1321 = vpop.permute.xlu0 %1320
        %1323 = vset.pattern.permute.xlu0 1
        %1324 = vperm.xlu0 %1323, %v823
        %v1325 = vpop.permute.xlu0 %1324
        %v1327 = vlaneseq
        %v1328 = vshrl.u32 %v1327, 7
        %v1329 = vsub.s32 1, %v1328
        %v1330 = vrot.slane %v844, %v1329
        %v1331 = vmax.f32 %v1265, %v1330
        %v1332 = vmax.f32 %v1269, %v1330
        %v1333 = vmax.f32 %v1273, %v1330
        %v1334 = vmax.f32 %v1277, %v1330
        %v1335 = vmax.f32 %v1281, %v1330
        %v1336 = vmax.f32 %v1285, %v1330
        %v1337 = vmax.f32 %v1289, %v1330
        %v1338 = vmax.f32 %v1293, %v1330
        %v1339 = vmax.f32 %v1297, %v1330
        %v1340 = vmax.f32 %v1301, %v1330
        %v1341 = vmax.f32 %v1305, %v1330
        %v1342 = vmax.f32 %v1309, %v1330
        %v1343 = vmax.f32 %v1313, %v1330
        %v1344 = vmax.f32 %v1317, %v1330
        %v1345 = vmax.f32 %v1321, %v1330
        %v1346 = vmax.f32 %v1325, %v1330
        %v1347 = vsub.f32 %v1247, %v1331
        %v1348 = vsub.f32 %v1248, %v1332
        %v1349 = vsub.f32 %v1249, %v1333
        %v1350 = vsub.f32 %v1250, %v1334
        %v1351 = vsub.f32 %v1251, %v1335
        %v1352 = vsub.f32 %v1252, %v1336
        %v1353 = vsub.f32 %v1253, %v1337
        %v1354 = vsub.f32 %v1254, %v1338
        %v1355 = vsub.f32 %v1255, %v1339
        %v1356 = vsub.f32 %v1256, %v1340
        %v1357 = vsub.f32 %v1257, %v1341
        %v1358 = vsub.f32 %v1258, %v1342
        %v1359 = vsub.f32 %v1259, %v1343
        %v1360 = vsub.f32 %v1260, %v1344
        %v1361 = vsub.f32 %v1261, %v1345
        %v1362 = vsub.f32 %v1262, %v1346
        %v1363 = vmax.f32 %v1347, 0.0
        %v1364 = vmax.f32 %v1348, 0.0
        %v1365 = vmax.f32 %v1349, 0.0
        %v1366 = vmax.f32 %v1350, 0.0
        %v1367 = vmax.f32 %v1351, 0.0
        %v1368 = vmax.f32 %v1352, 0.0
        %v1369 = vmax.f32 %v1353, 0.0
        %v1370 = vmax.f32 %v1354, 0.0
        %v1371 = vmax.f32 %v1355, 0.0
        %v1372 = vmax.f32 %v1356, 0.0
        %v1373 = vmax.f32 %v1357, 0.0
        %v1374 = vmax.f32 %v1358, 0.0
        %v1375 = vmax.f32 %v1359, 0.0
        %v1376 = vmax.f32 %v1360, 0.0
        %v1377 = vmax.f32 %v1361, 0.0
        %v1378 = vmax.f32 %v1362, 0.0
        %v1379 = vmul.f32 %v1163, %v1363
        %v1380 = vmul.f32 %v1164, %v1364
        %v1381 = vmul.f32 %v1165, %v1365
        %v1382 = vmul.f32 %v1166, %v1366
        %v1383 = vmul.f32 %v1167, %v1367
        %v1384 = vmul.f32 %v1168, %v1368
        %v1385 = vmul.f32 %v1169, %v1369
        %v1386 = vmul.f32 %v1170, %v1370
        %v1387 = vmul.f32 %v1171, %v1371
        %v1388 = vmul.f32 %v1172, %v1372
        %v1389 = vmul.f32 %v1173, %v1373
        %v1390 = vmul.f32 %v1174, %v1374
        %v1391 = vmul.f32 %v1175, %v1375
        %v1392 = vmul.f32 %v1176, %v1376
        %v1393 = vmul.f32 %v1177, %v1377
        %v1394 = vmul.f32 %v1178, %v1378
        %1396 = vset.pattern.permute.xlu0 0
        %1397 = vperm.xlu0 %1396, %v926
        %v1398 = vpop.permute.xlu0 %1397
        %1401 = vset.pattern.permute.xlu0 0
        %1402 = vperm.xlu0 %1401, %v927
        %v1403 = vpop.permute.xlu0 %1402
        %1406 = vset.pattern.permute.xlu0 0
        %1407 = vperm.xlu0 %1406, %v928
        %v1408 = vpop.permute.xlu0 %1407
        %1411 = vset.pattern.permute.xlu0 0
        %1412 = vperm.xlu0 %1411, %v929
        %v1413 = vpop.permute.xlu0 %1412
        %1416 = vset.pattern.permute.xlu0 0
        %1417 = vperm.xlu0 %1416, %v930
        %v1418 = vpop.permute.xlu0 %1417
        %1421 = vset.pattern.permute.xlu0 0
        %1422 = vperm.xlu0 %1421, %v931
        %v1423 = vpop.permute.xlu0 %1422
        %1426 = vset.pattern.permute.xlu0 0
        %1427 = vperm.xlu0 %1426, %v932
        %v1428 = vpop.permute.xlu0 %1427
        %1431 = vset.pattern.permute.xlu0 0
        %1432 = vperm.xlu0 %1431, %v933
        %v1433 = vpop.permute.xlu0 %1432
        %1436 = vset.pattern.permute.xlu0 0
        %1437 = vperm.xlu0 %1436, %v934
        %v1438 = vpop.permute.xlu0 %1437
        %1441 = vset.pattern.permute.xlu0 0
        %1442 = vperm.xlu0 %1441, %v935
        %v1443 = vpop.permute.xlu0 %1442
        %1446 = vset.pattern.permute.xlu0 0
        %1447 = vperm.xlu0 %1446, %v936
        %v1448 = vpop.permute.xlu0 %1447
        %1451 = vset.pattern.permute.xlu0 0
        %1452 = vperm.xlu0 %1451, %v937
        %v1453 = vpop.permute.xlu0 %1452
        %1456 = vset.pattern.permute.xlu0 0
        %1457 = vperm.xlu0 %1456, %v938
        %v1458 = vpop.permute.xlu0 %1457
        %1461 = vset.pattern.permute.xlu0 0
        %1462 = vperm.xlu0 %1461, %v939
        %v1463 = vpop.permute.xlu0 %1462
        %1466 = vset.pattern.permute.xlu0 0
        %1467 = vperm.xlu0 %1466, %v940
        %v1468 = vpop.permute.xlu0 %1467
        %1471 = vset.pattern.permute.xlu0 0
        %1472 = vperm.xlu0 %1471, %v941
        %v1473 = vpop.permute.xlu0 %1472
        %v1475 = vlaneseq
        %v1476 = vshrl.u32 %v1475, 7
        %v1477 = vsub.s32 0, %v1476
        %v1478 = vrot.slane %v946, %v1477
        %v1479 = vadd.f32 %v1398, %v1478
        %v1480 = vadd.f32 %v1403, %v1478
        %v1481 = vadd.f32 %v1408, %v1478
        %v1482 = vadd.f32 %v1413, %v1478
        %v1483 = vadd.f32 %v1418, %v1478
        %v1484 = vadd.f32 %v1423, %v1478
        %v1485 = vadd.f32 %v1428, %v1478
        %v1486 = vadd.f32 %v1433, %v1478
        %v1487 = vadd.f32 %v1438, %v1478
        %v1488 = vadd.f32 %v1443, %v1478
        %v1489 = vadd.f32 %v1448, %v1478
        %v1490 = vadd.f32 %v1453, %v1478
        %v1491 = vadd.f32 %v1458, %v1478
        %v1492 = vadd.f32 %v1463, %v1478
        %v1493 = vadd.f32 %v1468, %v1478
        %v1494 = vadd.f32 %v1473, %v1478
        %v1495 = vsub.f32 %v1479, %v1379
        %v1496 = vsub.f32 %v1480, %v1380
        %v1497 = vsub.f32 %v1481, %v1381
        %v1498 = vsub.f32 %v1482, %v1382
        %v1499 = vsub.f32 %v1483, %v1383
        %v1500 = vsub.f32 %v1484, %v1384
        %v1501 = vsub.f32 %v1485, %v1385
        %v1502 = vsub.f32 %v1486, %v1386
        %v1503 = vsub.f32 %v1487, %v1387
        %v1504 = vsub.f32 %v1488, %v1388
        %v1505 = vsub.f32 %v1489, %v1389
        %v1506 = vsub.f32 %v1490, %v1390
        %v1507 = vsub.f32 %v1491, %v1391
        %v1508 = vsub.f32 %v1492, %v1392
        %v1509 = vsub.f32 %v1493, %v1393
        %v1510 = vsub.f32 %v1494, %v1394
        %v1511 = vrcp.pop %v1495
        %v1512 = vrcp.pop %v1496
        %v1513 = vrcp.pop %v1497
        %v1514 = vrcp.pop %v1498
        %v1515 = vrcp.pop %v1499
        %v1516 = vrcp.pop %v1500
        %v1517 = vrcp.pop %v1501
        %v1518 = vrcp.pop %v1502
        %v1519 = vrcp.pop %v1503
        %v1520 = vrcp.pop %v1504
        %v1521 = vrcp.pop %v1505
        %v1522 = vrcp.pop %v1506
        %v1523 = vrcp.pop %v1507
        %v1524 = vrcp.pop %v1508
        %v1525 = vrcp.pop %v1509
        %v1526 = vrcp.pop %v1510
        %v1527 = vmul.f32 %v1379, %v1511
        %v1528 = vmul.f32 %v1380, %v1512
        %v1529 = vmul.f32 %v1381, %v1513
        %v1530 = vmul.f32 %v1382, %v1514
        %v1531 = vmul.f32 %v1383, %v1515
        %v1532 = vmul.f32 %v1384, %v1516
        %v1533 = vmul.f32 %v1385, %v1517
        %v1534 = vmul.f32 %v1386, %v1518
        %v1535 = vmul.f32 %v1387, %v1519
        %v1536 = vmul.f32 %v1388, %v1520
        %v1537 = vmul.f32 %v1389, %v1521
        %v1538 = vmul.f32 %v1390, %v1522
        %v1539 = vmul.f32 %v1391, %v1523
        %v1540 = vmul.f32 %v1392, %v1524
        %v1541 = vmul.f32 %v1393, %v1525
        %v1542 = vmul.f32 %v1394, %v1526
        %v1543 = vmax.f32 %v950, %v1030
        %v1544 = vmax.f32 %v955, %v1030
        %v1545 = vmax.f32 %v960, %v1030
        %v1546 = vmax.f32 %v965, %v1030
        %v1547 = vmax.f32 %v970, %v1030
        %v1548 = vmax.f32 %v975, %v1030
        %v1549 = vmax.f32 %v980, %v1030
        %v1550 = vmax.f32 %v985, %v1030
        %v1551 = vmax.f32 %v990, %v1030
        %v1552 = vmax.f32 %v995, %v1030
        %v1553 = vmax.f32 %v1000, %v1030
        %v1554 = vmax.f32 %v1005, %v1030
        %v1555 = vmax.f32 %v1010, %v1030
        %v1556 = vmax.f32 %v1015, %v1030
        %v1557 = vmax.f32 %v1020, %v1030
        %v1558 = vmax.f32 %v1025, %v1030
        %v1559 = vmin.f32 %v1050, %v1130
        %v1560 = vmin.f32 %v1055, %v1130
        %v1561 = vmin.f32 %v1060, %v1130
        %v1562 = vmin.f32 %v1065, %v1130
        %v1563 = vmin.f32 %v1070, %v1130
        %v1564 = vmin.f32 %v1075, %v1130
        %v1565 = vmin.f32 %v1080, %v1130
        %v1566 = vmin.f32 %v1085, %v1130
        %v1567 = vmin.f32 %v1090, %v1130
        %v1568 = vmin.f32 %v1095, %v1130
        %v1569 = vmin.f32 %v1100, %v1130
        %v1570 = vmin.f32 %v1105, %v1130
        %v1571 = vmin.f32 %v1110, %v1130
        %v1572 = vmin.f32 %v1115, %v1130
        %v1573 = vmin.f32 %v1120, %v1130
        %v1574 = vmin.f32 %v1125, %v1130
        %v1575 = vsub.f32 %v1543, %v1559
        %v1576 = vsub.f32 %v1544, %v1560
        %v1577 = vsub.f32 %v1545, %v1561
        %v1578 = vsub.f32 %v1546, %v1562
        %v1579 = vsub.f32 %v1547, %v1563
        %v1580 = vsub.f32 %v1548, %v1564
        %v1581 = vsub.f32 %v1549, %v1565
        %v1582 = vsub.f32 %v1550, %v1566
        %v1583 = vsub.f32 %v1551, %v1567
        %v1584 = vsub.f32 %v1552, %v1568
        %v1585 = vsub.f32 %v1553, %v1569
        %v1586 = vsub.f32 %v1554, %v1570
        %v1587 = vsub.f32 %v1555, %v1571
        %v1588 = vsub.f32 %v1556, %v1572
        %v1589 = vsub.f32 %v1557, %v1573
        %v1590 = vsub.f32 %v1558, %v1574
        %v1591 = vmax.f32 %v1575, 0.0
        %v1592 = vmax.f32 %v1576, 0.0
        %v1593 = vmax.f32 %v1577, 0.0
        %v1594 = vmax.f32 %v1578, 0.0
        %v1595 = vmax.f32 %v1579, 0.0
        %v1596 = vmax.f32 %v1580, 0.0
        %v1597 = vmax.f32 %v1581, 0.0
        %v1598 = vmax.f32 %v1582, 0.0
        %v1599 = vmax.f32 %v1583, 0.0
        %v1600 = vmax.f32 %v1584, 0.0
        %v1601 = vmax.f32 %v1585, 0.0
        %v1602 = vmax.f32 %v1586, 0.0
        %v1603 = vmax.f32 %v1587, 0.0
        %v1604 = vmax.f32 %v1588, 0.0
        %v1605 = vmax.f32 %v1589, 0.0
        %v1606 = vmax.f32 %v1590, 0.0
        %v1607 = vmax.f32 %v1181, %v1246
        %v1608 = vmax.f32 %v1185, %v1246
        %v1609 = vmax.f32 %v1189, %v1246
        %v1610 = vmax.f32 %v1193, %v1246
        %v1611 = vmax.f32 %v1197, %v1246
        %v1612 = vmax.f32 %v1201, %v1246
        %v1613 = vmax.f32 %v1205, %v1246
        %v1614 = vmax.f32 %v1209, %v1246
        %v1615 = vmax.f32 %v1213, %v1246
        %v1616 = vmax.f32 %v1217, %v1246
        %v1617 = vmax.f32 %v1221, %v1246
        %v1618 = vmax.f32 %v1225, %v1246
        %v1619 = vmax.f32 %v1229, %v1246
        %v1620 = vmax.f32 %v1233, %v1246
        %v1621 = vmax.f32 %v1237, %v1246
        %v1622 = vmax.f32 %v1241, %v1246
        %v1623 = vmin.f32 %v1265, %v1330
        %v1624 = vmin.f32 %v1269, %v1330
        %v1625 = vmin.f32 %v1273, %v1330
        %v1626 = vmin.f32 %v1277, %v1330
        %v1627 = vmin.f32 %v1281, %v1330
        %v1628 = vmin.f32 %v1285, %v1330
        %v1629 = vmin.f32 %v1289, %v1330
        %v1630 = vmin.f32 %v1293, %v1330
        %v1631 = vmin.f32 %v1297, %v1330
        %v1632 = vmin.f32 %v1301, %v1330
        %v1633 = vmin.f32 %v1305, %v1330
        %v1634 = vmin.f32 %v1309, %v1330
        %v1635 = vmin.f32 %v1313, %v1330
        %v1636 = vmin.f32 %v1317, %v1330
        %v1637 = vmin.f32 %v1321, %v1330
        %v1638 = vmin.f32 %v1325, %v1330
        %v1639 = vsub.f32 %v1607, %v1623
        %v1640 = vsub.f32 %v1608, %v1624
        %v1641 = vsub.f32 %v1609, %v1625
        %v1642 = vsub.f32 %v1610, %v1626
        %v1643 = vsub.f32 %v1611, %v1627
        %v1644 = vsub.f32 %v1612, %v1628
        %v1645 = vsub.f32 %v1613, %v1629
        %v1646 = vsub.f32 %v1614, %v1630
        %v1647 = vsub.f32 %v1615, %v1631
        %v1648 = vsub.f32 %v1616, %v1632
        %v1649 = vsub.f32 %v1617, %v1633
        %v1650 = vsub.f32 %v1618, %v1634
        %v1651 = vsub.f32 %v1619, %v1635
        %v1652 = vsub.f32 %v1620, %v1636
        %v1653 = vsub.f32 %v1621, %v1637
        %v1654 = vsub.f32 %v1622, %v1638
        %v1655 = vmax.f32 %v1639, 0.0
        %v1656 = vmax.f32 %v1640, 0.0
        %v1657 = vmax.f32 %v1641, 0.0
        %v1658 = vmax.f32 %v1642, 0.0
        %v1659 = vmax.f32 %v1643, 0.0
        %v1660 = vmax.f32 %v1644, 0.0
        %v1661 = vmax.f32 %v1645, 0.0
        %v1662 = vmax.f32 %v1646, 0.0
        %v1663 = vmax.f32 %v1647, 0.0
        %v1664 = vmax.f32 %v1648, 0.0
        %v1665 = vmax.f32 %v1649, 0.0
        %v1666 = vmax.f32 %v1650, 0.0
        %v1667 = vmax.f32 %v1651, 0.0
        %v1668 = vmax.f32 %v1652, 0.0
        %v1669 = vmax.f32 %v1653, 0.0
        %v1670 = vmax.f32 %v1654, 0.0
        %v1671 = vmul.f32 %v1591, %v1655
        %v1672 = vmul.f32 %v1592, %v1656
        %v1673 = vmul.f32 %v1593, %v1657
        %v1674 = vmul.f32 %v1594, %v1658
        %v1675 = vmul.f32 %v1595, %v1659
        %v1676 = vmul.f32 %v1596, %v1660
        %v1677 = vmul.f32 %v1597, %v1661
        %v1678 = vmul.f32 %v1598, %v1662
        %v1679 = vmul.f32 %v1599, %v1663
        %v1680 = vmul.f32 %v1600, %v1664
        %v1681 = vmul.f32 %v1601, %v1665
        %v1682 = vmul.f32 %v1602, %v1666
        %v1683 = vmul.f32 %v1603, %v1667
        %v1684 = vmul.f32 %v1604, %v1668
        %v1685 = vmul.f32 %v1605, %v1669
        %v1686 = vmul.f32 %v1606, %v1670
        %v1687 = vrcp.pop %v1671
        %v1688 = vrcp.pop %v1672
        %v1689 = vrcp.pop %v1673
        %v1690 = vrcp.pop %v1674
        %v1691 = vrcp.pop %v1675
        %v1692 = vrcp.pop %v1676
        %v1693 = vrcp.pop %v1677
        %v1694 = vrcp.pop %v1678
        %v1695 = vrcp.pop %v1679
        %v1696 = vrcp.pop %v1680
        %v1697 = vrcp.pop %v1681
        %v1698 = vrcp.pop %v1682
        %v1699 = vrcp.pop %v1683
        %v1700 = vrcp.pop %v1684
        %v1701 = vrcp.pop %v1685
        %v1702 = vrcp.pop %v1686
        %v1703 = vsub.f32 %v1671, %v1495
        %v1704 = vsub.f32 %v1672, %v1496
        %v1705 = vsub.f32 %v1673, %v1497
        %v1706 = vsub.f32 %v1674, %v1498
        %v1707 = vsub.f32 %v1675, %v1499
        %v1708 = vsub.f32 %v1676, %v1500
        %v1709 = vsub.f32 %v1677, %v1501
        %v1710 = vsub.f32 %v1678, %v1502
        %v1711 = vsub.f32 %v1679, %v1503
        %v1712 = vsub.f32 %v1680, %v1504
        %v1713 = vsub.f32 %v1681, %v1505
        %v1714 = vsub.f32 %v1682, %v1506
        %v1715 = vsub.f32 %v1683, %v1507
        %v1716 = vsub.f32 %v1684, %v1508
        %v1717 = vsub.f32 %v1685, %v1509
        %v1718 = vsub.f32 %v1686, %v1510
        %v1719 = vmul.f32 %v1703, %v1687
        %v1720 = vmul.f32 %v1704, %v1688
        %v1721 = vmul.f32 %v1705, %v1689
        %v1722 = vmul.f32 %v1706, %v1690
        %v1723 = vmul.f32 %v1707, %v1691
        %v1724 = vmul.f32 %v1708, %v1692
        %v1725 = vmul.f32 %v1709, %v1693
        %v1726 = vmul.f32 %v1710, %v1694
        %v1727 = vmul.f32 %v1711, %v1695
        %v1728 = vmul.f32 %v1712, %v1696
        %v1729 = vmul.f32 %v1713, %v1697
        %v1730 = vmul.f32 %v1714, %v1698
        %v1731 = vmul.f32 %v1715, %v1699
        %v1732 = vmul.f32 %v1716, %v1700
        %v1733 = vmul.f32 %v1717, %v1701
        %v1734 = vmul.f32 %v1718, %v1702
        %v1735 = vsub.f32 %v1527, %v1719
        %v1736 = vsub.f32 %v1528, %v1720
        %v1737 = vsub.f32 %v1529, %v1721
        %v1738 = vsub.f32 %v1530, %v1722
        %v1739 = vsub.f32 %v1531, %v1723
        %v1740 = vsub.f32 %v1532, %v1724
        %v1741 = vsub.f32 %v1533, %v1725
        %v1742 = vsub.f32 %v1534, %v1726
        %v1743 = vsub.f32 %v1535, %v1727
        %v1744 = vsub.f32 %v1536, %v1728
        %v1745 = vsub.f32 %v1537, %v1729
        %v1746 = vsub.f32 %v1538, %v1730
        %v1747 = vsub.f32 %v1539, %v1731
        %v1748 = vsub.f32 %v1540, %v1732
        %v1749 = vsub.f32 %v1541, %v1733
        %v1750 = vsub.f32 %v1542, %v1734
        %v1751 = vld [vmem:[%s243] sm:$0xff]
        %v1752 = vld [vmem:[%s243 + $0x8] sm:$0xff]
        %v1753 = vld [vmem:[%s243 + $0x10] sm:$0xff]
        %v1754 = vld [vmem:[%s243 + $0x18] sm:$0xff]
        %v1755 = vld [vmem:[%s243 + $0x20] sm:$0xff]
        %v1756 = vld [vmem:[%s243 + $0x28] sm:$0xff]
        %v1757 = vld [vmem:[%s243 + $0x30] sm:$0xff]
        %v1758 = vld [vmem:[%s243 + $0x38] sm:$0xff]
        %v1759 = vld [vmem:[%s243 + $0x40] sm:$0xff]
        %v1760 = vld [vmem:[%s243 + $0x48] sm:$0xff]
        %v1761 = vld [vmem:[%s243 + $0x50] sm:$0xff]
        %v1762 = vld [vmem:[%s243 + $0x58] sm:$0xff]
        %v1763 = vld [vmem:[%s243 + $0x60] sm:$0xff]
        %v1764 = vld [vmem:[%s243 + $0x68] sm:$0xff]
        %v1765 = vld [vmem:[%s243 + $0x70] sm:$0xff]
        %v1766 = vld [vmem:[%s243 + $0x78] sm:$0xff]
        %v1767 = vld [vmem:[%s246] sm:$0x1]
        %1768 = vset.pattern.permute.xlu0 0
        %1769 = vperm.xlu0 %1768, %v1751
        %v1770 = vpop.permute.xlu0 %1769
        %1771 = vset.pattern.permute.xlu0 0
        %1772 = vperm.xlu0 %1771, %v1752
        %v1773 = vpop.permute.xlu0 %1772
        %1774 = vset.pattern.permute.xlu0 0
        %1775 = vperm.xlu0 %1774, %v1753
        %v1776 = vpop.permute.xlu0 %1775
        %1777 = vset.pattern.permute.xlu0 0
        %1778 = vperm.xlu0 %1777, %v1754
        %v1779 = vpop.permute.xlu0 %1778
        %1780 = vset.pattern.permute.xlu0 0
        %1781 = vperm.xlu0 %1780, %v1755
        %v1782 = vpop.permute.xlu0 %1781
        %1783 = vset.pattern.permute.xlu0 0
        %1784 = vperm.xlu0 %1783, %v1756
        %v1785 = vpop.permute.xlu0 %1784
        %1786 = vset.pattern.permute.xlu0 0
        %1787 = vperm.xlu0 %1786, %v1757
        %v1788 = vpop.permute.xlu0 %1787
        %1789 = vset.pattern.permute.xlu0 0
        %1790 = vperm.xlu0 %1789, %v1758
        %v1791 = vpop.permute.xlu0 %1790
        %1792 = vset.pattern.permute.xlu0 0
        %1793 = vperm.xlu0 %1792, %v1759
        %v1794 = vpop.permute.xlu0 %1793
        %1795 = vset.pattern.permute.xlu0 0
        %1796 = vperm.xlu0 %1795, %v1760
        %v1797 = vpop.permute.xlu0 %1796
        %1798 = vset.pattern.permute.xlu0 0
        %1799 = vperm.xlu0 %1798, %v1761
        %v1800 = vpop.permute.xlu0 %1799
        %1801 = vset.pattern.permute.xlu0 0
        %1802 = vperm.xlu0 %1801, %v1762
        %v1803 = vpop.permute.xlu0 %1802
        %1804 = vset.pattern.permute.xlu0 0
        %1805 = vperm.xlu0 %1804, %v1763
        %v1806 = vpop.permute.xlu0 %1805
        %1807 = vset.pattern.permute.xlu0 0
        %1808 = vperm.xlu0 %1807, %v1764
        %v1809 = vpop.permute.xlu0 %1808
        %1810 = vset.pattern.permute.xlu0 0
        %1811 = vperm.xlu0 %1810, %v1765
        %v1812 = vpop.permute.xlu0 %1811
        %1813 = vset.pattern.permute.xlu0 0
        %1814 = vperm.xlu0 %1813, %v1766
        %v1815 = vpop.permute.xlu0 %1814
        %v1816 = vlaneseq
        %v1817 = vshrl.u32 %v1816, 7
        %v1818 = vsub.s32 0, %v1817
        %v1819 = vrot.slane %v1767, %v1818
        %vm1820 = vcmp.eq.s32.totalorder %v1770, %v1819
        %vm1821 = vcmp.eq.s32.totalorder %v1773, %v1819
        %vm1822 = vcmp.eq.s32.totalorder %v1776, %v1819
        %vm1823 = vcmp.eq.s32.totalorder %v1779, %v1819
        %vm1824 = vcmp.eq.s32.totalorder %v1782, %v1819
        %vm1825 = vcmp.eq.s32.totalorder %v1785, %v1819
        %vm1826 = vcmp.eq.s32.totalorder %v1788, %v1819
        %vm1827 = vcmp.eq.s32.totalorder %v1791, %v1819
        %vm1828 = vcmp.eq.s32.totalorder %v1794, %v1819
        %vm1829 = vcmp.eq.s32.totalorder %v1797, %v1819
        %vm1830 = vcmp.eq.s32.totalorder %v1800, %v1819
        %vm1831 = vcmp.eq.s32.totalorder %v1803, %v1819
        %vm1832 = vcmp.eq.s32.totalorder %v1806, %v1819
        %vm1833 = vcmp.eq.s32.totalorder %v1809, %v1819
        %vm1834 = vcmp.eq.s32.totalorder %v1812, %v1819
        %vm1835 = vcmp.eq.s32.totalorder %v1815, %v1819
        %v1836 = vsel %vm1820, 1, 0
        %v1837 = vsel %vm1821, 1, 0
        %v1838 = vsel %vm1822, 1, 0
        %v1839 = vsel %vm1823, 1, 0
        %v1840 = vsel %vm1824, 1, 0
        %v1841 = vsel %vm1825, 1, 0
        %v1842 = vsel %vm1826, 1, 0
        %v1843 = vsel %vm1827, 1, 0
        %v1844 = vsel %vm1828, 1, 0
        %v1845 = vsel %vm1829, 1, 0
        %v1846 = vsel %vm1830, 1, 0
        %v1847 = vsel %vm1831, 1, 0
        %v1848 = vsel %vm1832, 1, 0
        %v1849 = vsel %vm1833, 1, 0
        %v1850 = vsel %vm1834, 1, 0
        %v1851 = vsel %vm1835, 1, 0
        %v1852 = vcvt.s32.f32 %v1836
        %v1853 = vcvt.s32.f32 %v1837
        %v1854 = vcvt.s32.f32 %v1838
        %v1855 = vcvt.s32.f32 %v1839
        %v1856 = vcvt.s32.f32 %v1840
        %v1857 = vcvt.s32.f32 %v1841
        %v1858 = vcvt.s32.f32 %v1842
        %v1859 = vcvt.s32.f32 %v1843
        %v1860 = vcvt.s32.f32 %v1844
        %v1861 = vcvt.s32.f32 %v1845
        %v1862 = vcvt.s32.f32 %v1846
        %v1863 = vcvt.s32.f32 %v1847
        %v1864 = vcvt.s32.f32 %v1848
        %v1865 = vcvt.s32.f32 %v1849
        %v1866 = vcvt.s32.f32 %v1850
        %v1867 = vcvt.s32.f32 %v1851
        %v1868 = vmul.f32 %v1852, 100.0
        %v1869 = vmul.f32 %v1853, 100.0
        %v1870 = vmul.f32 %v1854, 100.0
        %v1871 = vmul.f32 %v1855, 100.0
        %v1872 = vmul.f32 %v1856, 100.0
        %v1873 = vmul.f32 %v1857, 100.0
        %v1874 = vmul.f32 %v1858, 100.0
        %v1875 = vmul.f32 %v1859, 100.0
        %v1876 = vmul.f32 %v1860, 100.0
        %v1877 = vmul.f32 %v1861, 100.0
        %v1878 = vmul.f32 %v1862, 100.0
        %v1879 = vmul.f32 %v1863, 100.0
        %v1880 = vmul.f32 %v1864, 100.0
        %v1881 = vmul.f32 %v1865, 100.0
        %v1882 = vmul.f32 %v1866, 100.0
        %v1883 = vmul.f32 %v1867, 100.0
        %v1884 = vsub.f32 %v712, %v1868
        %v1885 = vsub.f32 %v713, %v1869
        %v1886 = vsub.f32 %v714, %v1870
        %v1887 = vsub.f32 %v715, %v1871
        %v1888 = vsub.f32 %v716, %v1872
        %v1889 = vsub.f32 %v717, %v1873
        %v1890 = vsub.f32 %v718, %v1874
        %v1891 = vsub.f32 %v719, %v1875
        %v1892 = vsub.f32 %v720, %v1876
        %v1893 = vsub.f32 %v721, %v1877
        %v1894 = vsub.f32 %v722, %v1878
        %v1895 = vsub.f32 %v723, %v1879
        %v1896 = vsub.f32 %v724, %v1880
        %v1897 = vsub.f32 %v725, %v1881
        %v1898 = vsub.f32 %v726, %v1882
        %v1899 = vsub.f32 %v727, %v1883
        %v1900 = vsub.f32 %v1884, %v1735
        %v1901 = vsub.f32 %v1885, %v1736
        %v1902 = vsub.f32 %v1886, %v1737
        %v1903 = vsub.f32 %v1887, %v1738
        %v1904 = vsub.f32 %v1888, %v1739
        %v1905 = vsub.f32 %v1889, %v1740
        %v1906 = vsub.f32 %v1890, %v1741
        %v1907 = vsub.f32 %v1891, %v1742
        %v1908 = vsub.f32 %v1892, %v1743
        %v1909 = vsub.f32 %v1893, %v1744
        %v1910 = vsub.f32 %v1894, %v1745
        %v1911 = vsub.f32 %v1895, %v1746
        %v1912 = vsub.f32 %v1896, %v1747
        %v1913 = vsub.f32 %v1897, %v1748
        %v1914 = vsub.f32 %v1898, %v1749
        %v1915 = vsub.f32 %v1899, %v1750
        %1916 = vst [vmem:[%s229] sm:$0xff] %v1900
        %1917 = vst [vmem:[%s229 + $0x8] sm:$0xff] %v1901
        %1918 = vst [vmem:[%s229 + $0x10] sm:$0xff] %v1902
        %1919 = vst [vmem:[%s229 + $0x18] sm:$0xff] %v1903
        %1920 = vst [vmem:[%s229 + $0x20] sm:$0xff] %v1904
        %1921 = vst [vmem:[%s229 + $0x28] sm:$0xff] %v1905
        %1922 = vst [vmem:[%s229 + $0x30] sm:$0xff] %v1906
        %1923 = vst [vmem:[%s229 + $0x38] sm:$0xff] %v1907
        %1924 = vst [vmem:[%s229 + $0x40] sm:$0xff] %v1908
        %1925 = vst [vmem:[%s229 + $0x48] sm:$0xff] %v1909
        %1926 = vst [vmem:[%s229 + $0x50] sm:$0xff] %v1910
        %1927 = vst [vmem:[%s229 + $0x58] sm:$0xff] %v1911
        %1928 = vst [vmem:[%s229 + $0x60] sm:$0xff] %v1912
        %1929 = vst [vmem:[%s229 + $0x68] sm:$0xff] %v1913
        %1930 = vst [vmem:[%s229 + $0x70] sm:$0xff] %v1914
        %1931 = vst [vmem:[%s229 + $0x78] sm:$0xff] %v1915
        %s1932 = sand.u32 %s130, 1
        %s1933 = scalar_lea.sflag [#allocation3], %s1932
        %s1934 = sand.u32 %s130, 1
        %s1935 = smul.addr %s1934, 128
        %s1936 = scalar_lea.vmem [#allocation2], %s1935
        // Predicated region
        $region37: #{tpu_custom_call.1} parent=35 // pred_check
          %p1937 = pneg %p140
        $region38: #{tpu_custom_call.1} parent=35 // pred_check_branch
          %1939 = sbr.rel (%p1937) target = $region40
        $region39: #{tpu_custom_call.1} parent=35 // pred_region
          %s1941 = ssub.s32 2048, 2048
          %1942 = vsyncadd %s1933, %s1941
          %s1943 = smul.addr %s18, 16
          %s1944 = smul.addr %s1943, 128
          %s1945 = scalar_lea.hbm %s4, %s1944
          %s1946 = sshll.u32 %s1936, 4
          %s1947 = int_to_ptr.vmem [resolvable:$true] %s1946
          %1952 = dma.vmem_to_hbm [thread:$0]  %s1947, 2048, %s1945, %s1933, 128, 128, 8
        $region40: #{tpu_custom_call.1} parent=35 // pred_fallthru
          _
      $region36: #{tpu_custom_call.1} parent=5 // pred_fallthru
        _
      %p1953 = scmp.le.s32.totalorder 2, %s13
      // Predicated region
      $region41: #{tpu_custom_call.1} parent=5 // pred_check
        %p1954 = pneg %p1953
      $region42: #{tpu_custom_call.1} parent=5 // pred_check_branch
        %1956 = sbr.rel (%p1954) target = $region44
      $region43: #{tpu_custom_call.1} parent=5 // pred_region
        %s1957 = ssub.s32 %s13, 2
        // Predicated region
        $region45: #{tpu_custom_call.1} parent=43 // pred_check
          %p1958 = pneg %p146
        $region46: #{tpu_custom_call.1} parent=43 // pred_check_branch
          %1960 = sbr.rel (%p1958) target = $region48
        $region47: #{tpu_custom_call.1} parent=43 // pred_region
          %s1961 = sand.u32 %s131, 1
          %s1962 = scalar_lea.sflag [#allocation3], %s1961
          %s1963 = sand.u32 %s131, 1
          %s1964 = smul.addr %s1963, 128
          %s1965 = scalar_lea.vmem [#allocation2], %s1964
          %1966 = dma.done %s1962, 2048
        $region48: #{tpu_custom_call.1} parent=43 // pred_fallthru
          _
      $region44: #{tpu_custom_call.1} parent=5 // pred_fallthru
        _
    $region6: #{tpu_custom_call.1} parent=1 // loop_footer
      %s17 = sadd.s32 1, %s13
    $region7: #{tpu_custom_call.1} parent=1 // loop_footer_branch
      %12 = sbr.rel target = $region3
    $region8: #{tpu_custom_call.1} parent=1 // loop_exit
      _
    %1967 = vsyncpa [#allocation3], 1
    %s1968 = scalar_lea.sflag [#allocation3], 1
    %1969 = vsyncpa %s1968, 1

</llo_original>
